<compile_context>
chip_gen: v5e
topology: v5e:2x2
jax: 0.10.0
libtpu: 0.0.40
codegen_flags: <defaults>
</compile_context>

<pallas_src>
import functools

import jax
import jax.numpy as jnp
from jax.experimental import pallas as pl
from jax.experimental.pallas import tpu as pltpu


# ----------------------------- helpers -----------------------------

def _round_up(n, m):
    return ((n + m - 1) // m) * m


def _pad2(a, rows, cols, dtype=None):
    a = jnp.pad(a, ((0, rows - a.shape[0]), (0, cols - a.shape[1])))
    return a.astype(dtype) if dtype is not None else a


# ----------------------------- kernel -----------------------------

def predictive_model_kernel(
    hidden_dim,                                   # static (real hidden dim, for LN stats)
    # streamed batch tiles
    state_ref, action_ref,
    # stem: split Linear(d_in -> H) + LayerNorm
    w0s_ref, w0a_ref, b0_ref, g0_ref, be0_ref,
    # residual block 1
    r1w1_ref, r1b1_ref, r1g1_ref, r1be1_ref,
    r1w2_ref, r1b2_ref, r1g2_ref, r1be2_ref,
    # residual block 2
    r2w1_ref, r2b1_ref, r2g1_ref, r2be1_ref,
    r2w2_ref, r2b2_ref, r2g2_ref, r2be2_ref,
    # head
    wf_ref, bf_ref,
    # output tile
    o_ref,
):
    inv_d = 1.0 / float(hidden_dim)

    def layernorm(x, gamma, beta, eps=1e-5):
        # One-pass stats. Padded lanes of x are exactly zero, so full-width sums equal
        # real-width sums; dividing by the real hidden_dim gives exact mean/var.
        s = jnp.sum(x, axis=-1, keepdims=True)
        s2 = jnp.sum(x * x, axis=-1, keepdims=True)
        mu = s * inv_d
        var = s2 * inv_d - mu * mu
        r = jax.lax.rsqrt(var + eps)                 # EUP
        # gamma/beta are zero in padded lanes -> padded lanes stay exactly zero.
        return (x - mu) * r * gamma + beta

    def dot_bf16(x, w_ref):
        # bf16 x bf16 on the MXU, f32 accumulation.
        return jnp.dot(x.astype(jnp.bfloat16), w_ref[...],
                       preferred_element_type=jnp.float32)

    # Hoist all (1, dim) parameter reads (read once; broadcasting happens in the adds).
    b0, g0, be0 = b0_ref[...], g0_ref[...], be0_ref[...]
    r1b1, r1g1, r1be1 = r1b1_ref[...], r1g1_ref[...], r1be1_ref[...]
    r1b2, r1g2, r1be2 = r1b2_ref[...], r1g2_ref[...], r1be2_ref[...]
    r2b1, r2g1, r2be1 = r2b1_ref[...], r2g1_ref[...], r2be1_ref[...]
    r2b2, r2g2, r2be2 = r2b2_ref[...], r2g2_ref[...], r2be2_ref[...]
    bf = bf_ref[...]

    # stem: (state | action) @ W0 + b0 -> LN -> ReLU   (concat replaced by split matmul)
    h = dot_bf16(state_ref[...], w0s_ref) + dot_bf16(action_ref[...], w0a_ref) + b0
    h = jnp.maximum(layernorm(h, g0, be0), 0.0)

    def res_block(h, w1_ref, b1, g1, be1, w2_ref, b2, g2, be2):
        t = dot_bf16(h, w1_ref) + b1
        t = jnp.maximum(layernorm(t, g1, be1), 0.0)
        t = dot_bf16(t, w2_ref) + b2
        t = layernorm(t, g2, be2)
        return jnp.maximum(h + t, 0.0)               # residual + ReLU in f32

    h = res_block(h, r1w1_ref, r1b1, r1g1, r1be1, r1w2_ref, r1b2, r1g2, r1be2)
    h = res_block(h, r2w1_ref, r2b1, r2g1, r2be1, r2w2_ref, r2b2, r2g2, r2be2)

    # head: Linear(H -> num_inputs)
    o_ref[...] = (dot_bf16(h, wf_ref) + bf).astype(o_ref.dtype)


# ----------------------------- param packing -----------------------------

def prepare_kernel_params(params, num_inputs, num_actions, hidden_dim):
    """Split the stem weight, zero-pad the hidden dim to a lane multiple, cast
    matmul weights to bf16 (biases / LN params stay f32)."""
    (w0, b0, g0, be0,
     r1w1, r1b1, r1g1, r1be1, r1w2, r1b2, r1g2, r1be2,
     r2w1, r2b1, r2g1, r2be1, r2w2, r2b2, r2g2, r2be2,
     wf, bf) = params

    H_p = _round_up(hidden_dim, 128)

    w0s = w0[:num_inputs]        # [num_inputs,  H]
    w0a = w0[num_inputs:]        # [num_actions, H]

    def w_pad(w, rows, cols):
        return _pad2(w, rows, cols, jnp.bfloat16)

    def v_pad(v, cols):
        return _pad2(v, 1, cols, jnp.float32)

    return (
        w_pad(w0s, num_inputs, H_p), w_pad(w0a, num_actions, H_p),
        v_pad(b0, H_p), v_pad(g0, H_p), v_pad(be0, H_p),
        w_pad(r1w1, H_p, H_p), v_pad(r1b1, H_p), v_pad(r1g1, H_p), v_pad(r1be1, H_p),
        w_pad(r1w2, H_p, H_p), v_pad(r1b2, H_p), v_pad(r1g2, H_p), v_pad(r1be2, H_p),
        w_pad(r2w1, H_p, H_p), v_pad(r2b1, H_p), v_pad(r2g1, H_p), v_pad(r2be1, H_p),
        w_pad(r2w2, H_p, H_p), v_pad(r2b2, H_p), v_pad(r2g2, H_p), v_pad(r2be2, H_p),
        w_pad(wf, H_p, num_inputs), bf.astype(jnp.float32),
    )


# ----------------------------- wrapper -----------------------------

def predictive_model_forward(state, action, params, *, block_b=512):
    """state: [B, num_inputs], action: [B, num_actions] -> [B, num_inputs] (f32)."""
    B, num_inputs = state.shape
    num_actions = action.shape[1]
    hidden_dim = params[0].shape[1]

    kparams = prepare_kernel_params(params, num_inputs, num_actions, hidden_dim)

    # Batch tile: multiple of 8 sublanes; 512 rows is a good compromise
    # (v6e/v5e could go larger, v7x wants <=512 with its 64 MiB VMEM).
    TB = min(block_b, _round_up(B, 8))
    B_pad = _round_up(B, TB)
    if B_pad != B:
        state = jnp.pad(state, ((0, B_pad - B), (0, 0)))
        action = jnp.pad(action, ((0, B_pad - B), (0, 0)))

    grid = (B_pad // TB,)

    def stream_spec(cols):
        return pl.BlockSpec((TB, cols), lambda i: (i, 0))

    def resident_spec(arr):                 # constant block index -> fetched once
        return pl.BlockSpec(arr.shape, lambda i: (0, 0))

    in_specs = [stream_spec(num_inputs), stream_spec(num_actions)]
    in_specs += [resident_spec(p) for p in kparams]
    out_spec = stream_spec(num_inputs)

    flops = 2 * B_pad * ((num_inputs + num_actions) * hidden_dim
                         + 4 * hidden_dim * hidden_dim
                         + hidden_dim * num_inputs)
    bytes_accessed = int(state.size * 4 + action.size * 4 + B_pad * num_inputs * 4
                         + sum(int(p.size) * p.dtype.itemsize for p in kparams))
    cost = pl.CostEstimate(flops=int(flops),
                           transcendentals=int(6 * B_pad),
                           bytes_accessed=bytes_accessed)

    kernel = functools.partial(predictive_model_kernel, hidden_dim)

    out = pl.pallas_call(
        kernel,
        out_shape=jax.ShapeDtypeStruct((B_pad, num_inputs), jnp.float32),
        grid=grid,
        in_specs=in_specs,
        out_specs=out_spec,
        compiler_params=pltpu.CompilerParams(
            dimension_semantics=("parallel",),     # lets v7x use both TensorCores
            vmem_limit_bytes=32 * 1024 * 1024,     # safe on v5e/v6e/v7x; plenty of headroom
        ),
        cost_estimate=cost,
    )(state, action, *kparams)

    return out[:B]


# ----------------------------- params (deterministic, matches PyTorch init) -----------------------------

def xavier_uniform(key, fan_in, fan_out):
    bound = jnp.sqrt(6.0 / (fan_in + fan_out))
    # stored as [in, out] so forward is x @ W + b (== PyTorch x @ weight.T + bias)
    return jax.random.uniform(key, (fan_in, fan_out), jnp.float32, -bound, bound)


def init_params(key, num_inputs, num_actions, hidden_dim):
    d_in = num_inputs + num_actions
    keys = jax.random.split(key, 6)

    def lin(k, fi, fo):
        return xavier_uniform(k, fi, fo), jnp.zeros((1, fo), jnp.float32)

    def ln(dim):
        return jnp.ones((1, dim), jnp.float32), jnp.zeros((1, dim), jnp.float32)

    w0, b0 = lin(keys[0], d_in, hidden_dim)
    g0, be0 = ln(hidden_dim)

    r1w1, r1b1 = lin(keys[1], hidden_dim, hidden_dim)
    r1g1, r1be1 = ln(hidden_dim)
    r1w2, r1b2 = lin(keys[2], hidden_dim, hidden_dim)
    r1g2, r1be2 = ln(hidden_dim)

    r2w1, r2b1 = lin(keys[3], hidden_dim, hidden_dim)
    r2g1, r2be1 = ln(hidden_dim)
    r2w2, r2b2 = lin(keys[4], hidden_dim, hidden_dim)
    r2g2, r2be2 = ln(hidden_dim)

    wf, bf = lin(keys[5], hidden_dim, num_inputs)

    return (
        w0, b0, g0, be0,
        r1w1, r1b1, r1g1, r1be1, r1w2, r1b2, r1g2, r1be2,
        r2w1, r2b1, r2g1, r2be1, r2w2, r2b2, r2g2, r2be2,
        wf, bf,
    )


# ----------------------------- pure-JAX references -----------------------------

def reference_forward(state, action, params, matmul_dtype=jnp.float32):
    """matmul_dtype=f32  -> exact original (PyTorch) semantics.
       matmul_dtype=bf16 -> matches the kernel's mixed-precision matmul path."""
    (w0, b0, g0, be0,
     r1w1, r1b1, r1g1, r1be1, r1w2, r1b2, r1g2, r1be2,
     r2w1, r2b1, r2g1, r2be1, r2w2, r2b2, r2g2, r2be2,
     wf, bf) = params

    def mm(x, w):
        return jnp.dot(x.astype(matmul_dtype), w.astype(matmul_dtype),
                       preferred_element_type=jnp.float32)

    def lnorm(x, g, b, eps=1e-5):
        mu = jnp.mean(x, axis=-1, keepdims=True)
        var = jnp.mean((x - mu) ** 2, axis=-1, keepdims=True)
        return (x - mu) / jnp.sqrt(var + eps) * g + b

    x = jnp.concatenate([state, action], axis=1)
    h = jax.nn.relu(lnorm(mm(x, w0) + b0, g0, be0))
    for (w1, b1, lg1, lb1, w2, b2, lg2, lb2) in (
        (r1w1, r1b1, r1g1, r1be1, r1w2, r1b2, r1g2, r1be2),
        (r2w1, r2b1, r2g1, r2be1, r2w2, r2b2, r2g2, r2be2),
    ):
        t = jax.nn.relu(lnorm(mm(h, w1) + b1, lg1, lb1))
        t = lnorm(mm(t, w2) + b2, lg2, lb2)
        h = jax.nn.relu(h + t)
    return mm(h, wf) + bf


# ----------------------------- main -----------------------------

if __name__ == "__main__":
    num_inputs, num_actions, hidden_dim, batch = 16, 8, 32, 8

    key = jax.random.PRNGKey(0)
    k_state, k_action, k_params = jax.random.split(key, 3)

    state = jax.random.normal(k_state, (batch, num_inputs), jnp.float32)
    action = jax.random.normal(k_action, (batch, num_actions), jnp.float32)
    params = init_params(k_params, num_inputs, num_actions, hidden_dim)

    out = predictive_model_forward(state, action, params)
    out = jax.block_until_ready(out)
    assert out.shape == (batch, num_inputs)

    # Tight check vs a reference that uses the same bf16-matmul / f32-accumulate path.
    ref_bf16 = reference_forward(state, action, params, matmul_dtype=jnp.bfloat16)
    assert jnp.allclose(out, ref_bf16, atol=1e-3, rtol=1e-3), "mismatch vs bf16-matched reference"

    # Semantic check vs the full-f32 original model (bf16 matmuls keep ~1e-2 accuracy here).
    ref_f32 = reference_forward(state, action, params, matmul_dtype=jnp.float32)
    assert jnp.allclose(out, ref_f32, atol=5e-2, rtol=5e-2), "mismatch vs f32 reference"

    print("KERNEL_OK")
</pallas_src>

<mosaic_0001>
module attributes {stable_mosaic.version = 11 : i64} {
  func.func @predictive_model_kernel(%arg0: i32, %arg1: memref<8x16xf32, #tpu.memory_space<vmem>>, %arg2: memref<8x8xf32, #tpu.memory_space<vmem>>, %arg3: memref<16x128xbf16, #tpu.memory_space<vmem>>, %arg4: memref<8x128xbf16, #tpu.memory_space<vmem>>, %arg5: memref<1x128xf32, #tpu.memory_space<vmem>>, %arg6: memref<1x128xf32, #tpu.memory_space<vmem>>, %arg7: memref<1x128xf32, #tpu.memory_space<vmem>>, %arg8: memref<128x128xbf16, #tpu.memory_space<vmem>>, %arg9: memref<1x128xf32, #tpu.memory_space<vmem>>, %arg10: memref<1x128xf32, #tpu.memory_space<vmem>>, %arg11: memref<1x128xf32, #tpu.memory_space<vmem>>, %arg12: memref<128x128xbf16, #tpu.memory_space<vmem>>, %arg13: memref<1x128xf32, #tpu.memory_space<vmem>>, %arg14: memref<1x128xf32, #tpu.memory_space<vmem>>, %arg15: memref<1x128xf32, #tpu.memory_space<vmem>>, %arg16: memref<128x128xbf16, #tpu.memory_space<vmem>>, %arg17: memref<1x128xf32, #tpu.memory_space<vmem>>, %arg18: memref<1x128xf32, #tpu.memory_space<vmem>>, %arg19: memref<1x128xf32, #tpu.memory_space<vmem>>, %arg20: memref<128x128xbf16, #tpu.memory_space<vmem>>, %arg21: memref<1x128xf32, #tpu.memory_space<vmem>>, %arg22: memref<1x128xf32, #tpu.memory_space<vmem>>, %arg23: memref<1x128xf32, #tpu.memory_space<vmem>>, %arg24: memref<128x16xbf16, #tpu.memory_space<vmem>>, %arg25: memref<1x16xf32, #tpu.memory_space<vmem>>, %arg26: memref<8x16xf32, #tpu.memory_space<vmem>>) attributes {dimension_semantics = [#tpu.dimension_semantics<parallel>], iteration_bounds = array<i64: 1>, scalar_prefetch = 0 : i64, scratch_operands = 0 : i64, tpu.core_type = #tpu.core_type<tc>, window_params = [{transform_indices = @transform_0, window_bounds = array<i64: 8, 16>}, {transform_indices = @transform_1, window_bounds = array<i64: 8, 8>}, {pipeline_mode = #tpu.pipeline_mode<synchronous>, transform_indices = @transform_2, window_bounds = array<i64: 16, 128>}, {pipeline_mode = #tpu.pipeline_mode<synchronous>, transform_indices = @transform_3, window_bounds = array<i64: 8, 128>}, {pipeline_mode = #tpu.pipeline_mode<synchronous>, transform_indices = @transform_4, window_bounds = array<i64: 1, 128>}, {pipeline_mode = #tpu.pipeline_mode<synchronous>, transform_indices = @transform_5, window_bounds = array<i64: 1, 128>}, {pipeline_mode = #tpu.pipeline_mode<synchronous>, transform_indices = @transform_6, window_bounds = array<i64: 1, 128>}, {pipeline_mode = #tpu.pipeline_mode<synchronous>, transform_indices = @transform_7, window_bounds = array<i64: 128, 128>}, {pipeline_mode = #tpu.pipeline_mode<synchronous>, transform_indices = @transform_8, window_bounds = array<i64: 1, 128>}, {pipeline_mode = #tpu.pipeline_mode<synchronous>, transform_indices = @transform_9, window_bounds = array<i64: 1, 128>}, {pipeline_mode = #tpu.pipeline_mode<synchronous>, transform_indices = @transform_10, window_bounds = array<i64: 1, 128>}, {pipeline_mode = #tpu.pipeline_mode<synchronous>, transform_indices = @transform_11, window_bounds = array<i64: 128, 128>}, {pipeline_mode = #tpu.pipeline_mode<synchronous>, transform_indices = @transform_12, window_bounds = array<i64: 1, 128>}, {pipeline_mode = #tpu.pipeline_mode<synchronous>, transform_indices = @transform_13, window_bounds = array<i64: 1, 128>}, {pipeline_mode = #tpu.pipeline_mode<synchronous>, transform_indices = @transform_14, window_bounds = array<i64: 1, 128>}, {pipeline_mode = #tpu.pipeline_mode<synchronous>, transform_indices = @transform_15, window_bounds = array<i64: 128, 128>}, {pipeline_mode = #tpu.pipeline_mode<synchronous>, transform_indices = @transform_16, window_bounds = array<i64: 1, 128>}, {pipeline_mode = #tpu.pipeline_mode<synchronous>, transform_indices = @transform_17, window_bounds = array<i64: 1, 128>}, {pipeline_mode = #tpu.pipeline_mode<synchronous>, transform_indices = @transform_18, window_bounds = array<i64: 1, 128>}, {pipeline_mode = #tpu.pipeline_mode<synchronous>, transform_indices = @transform_19, window_bounds = array<i64: 128, 128>}, {pipeline_mode = #tpu.pipeline_mode<synchronous>, transform_indices = @transform_20, window_bounds = array<i64: 1, 128>}, {pipeline_mode = #tpu.pipeline_mode<synchronous>, transform_indices = @transform_21, window_bounds = array<i64: 1, 128>}, {pipeline_mode = #tpu.pipeline_mode<synchronous>, transform_indices = @transform_22, window_bounds = array<i64: 1, 128>}, {pipeline_mode = #tpu.pipeline_mode<synchronous>, transform_indices = @transform_23, window_bounds = array<i64: 128, 16>}, {pipeline_mode = #tpu.pipeline_mode<synchronous>, transform_indices = @transform_24, window_bounds = array<i64: 1, 16>}, {transform_indices = @transform_25, window_bounds = array<i64: 8, 16>}]} {
    %c0 = arith.constant 0 : index
    %c0_0 = arith.constant 0 : index
    %0 = vector.load %arg5[%c0, %c0_0] : memref<1x128xf32, #tpu.memory_space<vmem>>, vector<1x128xf32>
    %c0_1 = arith.constant 0 : index
    %c0_2 = arith.constant 0 : index
    %1 = vector.load %arg6[%c0_1, %c0_2] : memref<1x128xf32, #tpu.memory_space<vmem>>, vector<1x128xf32>
    %c0_3 = arith.constant 0 : index
    %c0_4 = arith.constant 0 : index
    %2 = vector.load %arg7[%c0_3, %c0_4] : memref<1x128xf32, #tpu.memory_space<vmem>>, vector<1x128xf32>
    %c0_5 = arith.constant 0 : index
    %c0_6 = arith.constant 0 : index
    %3 = vector.load %arg9[%c0_5, %c0_6] : memref<1x128xf32, #tpu.memory_space<vmem>>, vector<1x128xf32>
    %c0_7 = arith.constant 0 : index
    %c0_8 = arith.constant 0 : index
    %4 = vector.load %arg10[%c0_7, %c0_8] : memref<1x128xf32, #tpu.memory_space<vmem>>, vector<1x128xf32>
    %c0_9 = arith.constant 0 : index
    %c0_10 = arith.constant 0 : index
    %5 = vector.load %arg11[%c0_9, %c0_10] : memref<1x128xf32, #tpu.memory_space<vmem>>, vector<1x128xf32>
    %c0_11 = arith.constant 0 : index
    %c0_12 = arith.constant 0 : index
    %6 = vector.load %arg13[%c0_11, %c0_12] : memref<1x128xf32, #tpu.memory_space<vmem>>, vector<1x128xf32>
    %c0_13 = arith.constant 0 : index
    %c0_14 = arith.constant 0 : index
    %7 = vector.load %arg14[%c0_13, %c0_14] : memref<1x128xf32, #tpu.memory_space<vmem>>, vector<1x128xf32>
    %c0_15 = arith.constant 0 : index
    %c0_16 = arith.constant 0 : index
    %8 = vector.load %arg15[%c0_15, %c0_16] : memref<1x128xf32, #tpu.memory_space<vmem>>, vector<1x128xf32>
    %c0_17 = arith.constant 0 : index
    %c0_18 = arith.constant 0 : index
    %9 = vector.load %arg17[%c0_17, %c0_18] : memref<1x128xf32, #tpu.memory_space<vmem>>, vector<1x128xf32>
    %c0_19 = arith.constant 0 : index
    %c0_20 = arith.constant 0 : index
    %10 = vector.load %arg18[%c0_19, %c0_20] : memref<1x128xf32, #tpu.memory_space<vmem>>, vector<1x128xf32>
    %c0_21 = arith.constant 0 : index
    %c0_22 = arith.constant 0 : index
    %11 = vector.load %arg19[%c0_21, %c0_22] : memref<1x128xf32, #tpu.memory_space<vmem>>, vector<1x128xf32>
    %c0_23 = arith.constant 0 : index
    %c0_24 = arith.constant 0 : index
    %12 = vector.load %arg21[%c0_23, %c0_24] : memref<1x128xf32, #tpu.memory_space<vmem>>, vector<1x128xf32>
    %c0_25 = arith.constant 0 : index
    %c0_26 = arith.constant 0 : index
    %13 = vector.load %arg22[%c0_25, %c0_26] : memref<1x128xf32, #tpu.memory_space<vmem>>, vector<1x128xf32>
    %c0_27 = arith.constant 0 : index
    %c0_28 = arith.constant 0 : index
    %14 = vector.load %arg23[%c0_27, %c0_28] : memref<1x128xf32, #tpu.memory_space<vmem>>, vector<1x128xf32>
    %c0_29 = arith.constant 0 : index
    %c0_30 = arith.constant 0 : index
    %15 = vector.load %arg25[%c0_29, %c0_30] : memref<1x16xf32, #tpu.memory_space<vmem>>, vector<1x16xf32>
    %c0_31 = arith.constant 0 : index
    %c0_32 = arith.constant 0 : index
    %16 = vector.load %arg1[%c0_31, %c0_32] : memref<8x16xf32, #tpu.memory_space<vmem>>, vector<8x16xf32>
    %17 = arith.truncf %16 : vector<8x16xf32> to vector<8x16xbf16>
    %c0_33 = arith.constant 0 : index
    %c0_34 = arith.constant 0 : index
    %18 = vector.load %arg3[%c0_33, %c0_34] : memref<16x128xbf16, #tpu.memory_space<vmem>>, vector<16x128xbf16>
    %cst = arith.constant dense<0.000000e+00> : vector<8x128xf32>
    %19 = tpu.matmul %17, %18, %cst {dimension_numbers = #tpu.dot_dimension_numbers<[1], [0], [0], [1], [0, 0, 1, 1], [], []>} : vector<8x16xbf16>, vector<16x128xbf16>, vector<8x128xf32> -> vector<8x128xf32>
    %c0_35 = arith.constant 0 : index
    %c0_36 = arith.constant 0 : index
    %20 = vector.load %arg2[%c0_35, %c0_36] : memref<8x8xf32, #tpu.memory_space<vmem>>, vector<8x8xf32>
    %21 = arith.truncf %20 : vector<8x8xf32> to vector<8x8xbf16>
    %c0_37 = arith.constant 0 : index
    %c0_38 = arith.constant 0 : index
    %22 = vector.load %arg4[%c0_37, %c0_38] : memref<8x128xbf16, #tpu.memory_space<vmem>>, vector<8x128xbf16>
    %cst_39 = arith.constant dense<0.000000e+00> : vector<8x128xf32>
    %23 = tpu.matmul %21, %22, %cst_39 {dimension_numbers = #tpu.dot_dimension_numbers<[1], [0], [0], [1], [0, 0, 1, 1], [], []>} : vector<8x8xbf16>, vector<8x128xbf16>, vector<8x128xf32> -> vector<8x128xf32>
    %24 = arith.addf %19, %23 : vector<8x128xf32>
    %25 = vector.broadcast %0 : vector<1x128xf32> to vector<8x128xf32>
    %26 = arith.addf %24, %25 : vector<8x128xf32>
    %cst_40 = arith.constant dense<0.000000e+00> : vector<8xf32>
    %27 = vector.multi_reduction <add>, %26, %cst_40 [1] : vector<8x128xf32> to vector<8xf32>
    %28 = vector.shape_cast %27 : vector<8xf32> to vector<8x1xf32>
    %29 = arith.mulf %26, %26 : vector<8x128xf32>
    %cst_41 = arith.constant dense<0.000000e+00> : vector<8xf32>
    %30 = vector.multi_reduction <add>, %29, %cst_41 [1] : vector<8x128xf32> to vector<8xf32>
    %31 = vector.shape_cast %30 : vector<8xf32> to vector<8x1xf32>
    %cst_42 = arith.constant 3.125000e-02 : f32
    %32 = vector.broadcast %cst_42 : f32 to vector<8x1xf32>
    %33 = arith.mulf %28, %32 : vector<8x1xf32>
    %cst_43 = arith.constant 3.125000e-02 : f32
    %34 = vector.broadcast %cst_43 : f32 to vector<8x1xf32>
    %35 = arith.mulf %31, %34 : vector<8x1xf32>
    %36 = arith.mulf %33, %33 : vector<8x1xf32>
    %37 = arith.subf %35, %36 : vector<8x1xf32>
    %cst_44 = arith.constant 9.99999974E-6 : f32
    %38 = vector.broadcast %cst_44 : f32 to vector<8x1xf32>
    %39 = arith.addf %37, %38 : vector<8x1xf32>
    %40 = math.rsqrt %39 : vector<8x1xf32>
    %41 = vector.broadcast %33 : vector<8x1xf32> to vector<8x128xf32>
    %42 = arith.subf %26, %41 : vector<8x128xf32>
    %43 = vector.broadcast %40 : vector<8x1xf32> to vector<8x128xf32>
    %44 = arith.mulf %42, %43 : vector<8x128xf32>
    %45 = vector.broadcast %1 : vector<1x128xf32> to vector<8x128xf32>
    %46 = arith.mulf %44, %45 : vector<8x128xf32>
    %47 = vector.broadcast %2 : vector<1x128xf32> to vector<8x128xf32>
    %48 = arith.addf %46, %47 : vector<8x128xf32>
    %cst_45 = arith.constant 0.000000e+00 : f32
    %49 = vector.broadcast %cst_45 : f32 to vector<8x128xf32>
    %50 = arith.maximumf %48, %49 : vector<8x128xf32>
    %51 = arith.truncf %50 : vector<8x128xf32> to vector<8x128xbf16>
    %c0_46 = arith.constant 0 : index
    %c0_47 = arith.constant 0 : index
    %52 = vector.load %arg8[%c0_46, %c0_47] : memref<128x128xbf16, #tpu.memory_space<vmem>>, vector<128x128xbf16>
    %cst_48 = arith.constant dense<0.000000e+00> : vector<8x128xf32>
    %53 = tpu.matmul %51, %52, %cst_48 {dimension_numbers = #tpu.dot_dimension_numbers<[1], [0], [0], [1], [0, 0, 1, 1], [], []>} : vector<8x128xbf16>, vector<128x128xbf16>, vector<8x128xf32> -> vector<8x128xf32>
    %54 = vector.broadcast %3 : vector<1x128xf32> to vector<8x128xf32>
    %55 = arith.addf %53, %54 : vector<8x128xf32>
    %cst_49 = arith.constant dense<0.000000e+00> : vector<8xf32>
    %56 = vector.multi_reduction <add>, %55, %cst_49 [1] : vector<8x128xf32> to vector<8xf32>
    %57 = vector.shape_cast %56 : vector<8xf32> to vector<8x1xf32>
    %58 = arith.mulf %55, %55 : vector<8x128xf32>
    %cst_50 = arith.constant dense<0.000000e+00> : vector<8xf32>
    %59 = vector.multi_reduction <add>, %58, %cst_50 [1] : vector<8x128xf32> to vector<8xf32>
    %60 = vector.shape_cast %59 : vector<8xf32> to vector<8x1xf32>
    %cst_51 = arith.constant 3.125000e-02 : f32
    %61 = vector.broadcast %cst_51 : f32 to vector<8x1xf32>
    %62 = arith.mulf %57, %61 : vector<8x1xf32>
    %cst_52 = arith.constant 3.125000e-02 : f32
    %63 = vector.broadcast %cst_52 : f32 to vector<8x1xf32>
    %64 = arith.mulf %60, %63 : vector<8x1xf32>
    %65 = arith.mulf %62, %62 : vector<8x1xf32>
    %66 = arith.subf %64, %65 : vector<8x1xf32>
    %cst_53 = arith.constant 9.99999974E-6 : f32
    %67 = vector.broadcast %cst_53 : f32 to vector<8x1xf32>
    %68 = arith.addf %66, %67 : vector<8x1xf32>
    %69 = math.rsqrt %68 : vector<8x1xf32>
    %70 = vector.broadcast %62 : vector<8x1xf32> to vector<8x128xf32>
    %71 = arith.subf %55, %70 : vector<8x128xf32>
    %72 = vector.broadcast %69 : vector<8x1xf32> to vector<8x128xf32>
    %73 = arith.mulf %71, %72 : vector<8x128xf32>
    %74 = vector.broadcast %4 : vector<1x128xf32> to vector<8x128xf32>
    %75 = arith.mulf %73, %74 : vector<8x128xf32>
    %76 = vector.broadcast %5 : vector<1x128xf32> to vector<8x128xf32>
    %77 = arith.addf %75, %76 : vector<8x128xf32>
    %cst_54 = arith.constant 0.000000e+00 : f32
    %78 = vector.broadcast %cst_54 : f32 to vector<8x128xf32>
    %79 = arith.maximumf %77, %78 : vector<8x128xf32>
    %80 = arith.truncf %79 : vector<8x128xf32> to vector<8x128xbf16>
    %c0_55 = arith.constant 0 : index
    %c0_56 = arith.constant 0 : index
    %81 = vector.load %arg12[%c0_55, %c0_56] : memref<128x128xbf16, #tpu.memory_space<vmem>>, vector<128x128xbf16>
    %cst_57 = arith.constant dense<0.000000e+00> : vector<8x128xf32>
    %82 = tpu.matmul %80, %81, %cst_57 {dimension_numbers = #tpu.dot_dimension_numbers<[1], [0], [0], [1], [0, 0, 1, 1], [], []>} : vector<8x128xbf16>, vector<128x128xbf16>, vector<8x128xf32> -> vector<8x128xf32>
    %83 = vector.broadcast %6 : vector<1x128xf32> to vector<8x128xf32>
    %84 = arith.addf %82, %83 : vector<8x128xf32>
    %cst_58 = arith.constant dense<0.000000e+00> : vector<8xf32>
    %85 = vector.multi_reduction <add>, %84, %cst_58 [1] : vector<8x128xf32> to vector<8xf32>
    %86 = vector.shape_cast %85 : vector<8xf32> to vector<8x1xf32>
    %87 = arith.mulf %84, %84 : vector<8x128xf32>
    %cst_59 = arith.constant dense<0.000000e+00> : vector<8xf32>
    %88 = vector.multi_reduction <add>, %87, %cst_59 [1] : vector<8x128xf32> to vector<8xf32>
    %89 = vector.shape_cast %88 : vector<8xf32> to vector<8x1xf32>
    %cst_60 = arith.constant 3.125000e-02 : f32
    %90 = vector.broadcast %cst_60 : f32 to vector<8x1xf32>
    %91 = arith.mulf %86, %90 : vector<8x1xf32>
    %cst_61 = arith.constant 3.125000e-02 : f32
    %92 = vector.broadcast %cst_61 : f32 to vector<8x1xf32>
    %93 = arith.mulf %89, %92 : vector<8x1xf32>
    %94 = arith.mulf %91, %91 : vector<8x1xf32>
    %95 = arith.subf %93, %94 : vector<8x1xf32>
    %cst_62 = arith.constant 9.99999974E-6 : f32
    %96 = vector.broadcast %cst_62 : f32 to vector<8x1xf32>
    %97 = arith.addf %95, %96 : vector<8x1xf32>
    %98 = math.rsqrt %97 : vector<8x1xf32>
    %99 = vector.broadcast %91 : vector<8x1xf32> to vector<8x128xf32>
    %100 = arith.subf %84, %99 : vector<8x128xf32>
    %101 = vector.broadcast %98 : vector<8x1xf32> to vector<8x128xf32>
    %102 = arith.mulf %100, %101 : vector<8x128xf32>
    %103 = vector.broadcast %7 : vector<1x128xf32> to vector<8x128xf32>
    %104 = arith.mulf %102, %103 : vector<8x128xf32>
    %105 = vector.broadcast %8 : vector<1x128xf32> to vector<8x128xf32>
    %106 = arith.addf %104, %105 : vector<8x128xf32>
    %107 = arith.addf %50, %106 : vector<8x128xf32>
    %cst_63 = arith.constant 0.000000e+00 : f32
    %108 = vector.broadcast %cst_63 : f32 to vector<8x128xf32>
    %109 = arith.maximumf %107, %108 : vector<8x128xf32>
    %110 = arith.truncf %109 : vector<8x128xf32> to vector<8x128xbf16>
    %c0_64 = arith.constant 0 : index
    %c0_65 = arith.constant 0 : index
    %111 = vector.load %arg16[%c0_64, %c0_65] : memref<128x128xbf16, #tpu.memory_space<vmem>>, vector<128x128xbf16>
    %cst_66 = arith.constant dense<0.000000e+00> : vector<8x128xf32>
    %112 = tpu.matmul %110, %111, %cst_66 {dimension_numbers = #tpu.dot_dimension_numbers<[1], [0], [0], [1], [0, 0, 1, 1], [], []>} : vector<8x128xbf16>, vector<128x128xbf16>, vector<8x128xf32> -> vector<8x128xf32>
    %113 = vector.broadcast %9 : vector<1x128xf32> to vector<8x128xf32>
    %114 = arith.addf %112, %113 : vector<8x128xf32>
    %cst_67 = arith.constant dense<0.000000e+00> : vector<8xf32>
    %115 = vector.multi_reduction <add>, %114, %cst_67 [1] : vector<8x128xf32> to vector<8xf32>
    %116 = vector.shape_cast %115 : vector<8xf32> to vector<8x1xf32>
    %117 = arith.mulf %114, %114 : vector<8x128xf32>
    %cst_68 = arith.constant dense<0.000000e+00> : vector<8xf32>
    %118 = vector.multi_reduction <add>, %117, %cst_68 [1] : vector<8x128xf32> to vector<8xf32>
    %119 = vector.shape_cast %118 : vector<8xf32> to vector<8x1xf32>
    %cst_69 = arith.constant 3.125000e-02 : f32
    %120 = vector.broadcast %cst_69 : f32 to vector<8x1xf32>
    %121 = arith.mulf %116, %120 : vector<8x1xf32>
    %cst_70 = arith.constant 3.125000e-02 : f32
    %122 = vector.broadcast %cst_70 : f32 to vector<8x1xf32>
    %123 = arith.mulf %119, %122 : vector<8x1xf32>
    %124 = arith.mulf %121, %121 : vector<8x1xf32>
    %125 = arith.subf %123, %124 : vector<8x1xf32>
    %cst_71 = arith.constant 9.99999974E-6 : f32
    %126 = vector.broadcast %cst_71 : f32 to vector<8x1xf32>
    %127 = arith.addf %125, %126 : vector<8x1xf32>
    %128 = math.rsqrt %127 : vector<8x1xf32>
    %129 = vector.broadcast %121 : vector<8x1xf32> to vector<8x128xf32>
    %130 = arith.subf %114, %129 : vector<8x128xf32>
    %131 = vector.broadcast %128 : vector<8x1xf32> to vector<8x128xf32>
    %132 = arith.mulf %130, %131 : vector<8x128xf32>
    %133 = vector.broadcast %10 : vector<1x128xf32> to vector<8x128xf32>
    %134 = arith.mulf %132, %133 : vector<8x128xf32>
    %135 = vector.broadcast %11 : vector<1x128xf32> to vector<8x128xf32>
    %136 = arith.addf %134, %135 : vector<8x128xf32>
    %cst_72 = arith.constant 0.000000e+00 : f32
    %137 = vector.broadcast %cst_72 : f32 to vector<8x128xf32>
    %138 = arith.maximumf %136, %137 : vector<8x128xf32>
    %139 = arith.truncf %138 : vector<8x128xf32> to vector<8x128xbf16>
    %c0_73 = arith.constant 0 : index
    %c0_74 = arith.constant 0 : index
    %140 = vector.load %arg20[%c0_73, %c0_74] : memref<128x128xbf16, #tpu.memory_space<vmem>>, vector<128x128xbf16>
    %cst_75 = arith.constant dense<0.000000e+00> : vector<8x128xf32>
    %141 = tpu.matmul %139, %140, %cst_75 {dimension_numbers = #tpu.dot_dimension_numbers<[1], [0], [0], [1], [0, 0, 1, 1], [], []>} : vector<8x128xbf16>, vector<128x128xbf16>, vector<8x128xf32> -> vector<8x128xf32>
    %142 = vector.broadcast %12 : vector<1x128xf32> to vector<8x128xf32>
    %143 = arith.addf %141, %142 : vector<8x128xf32>
    %cst_76 = arith.constant dense<0.000000e+00> : vector<8xf32>
    %144 = vector.multi_reduction <add>, %143, %cst_76 [1] : vector<8x128xf32> to vector<8xf32>
    %145 = vector.shape_cast %144 : vector<8xf32> to vector<8x1xf32>
    %146 = arith.mulf %143, %143 : vector<8x128xf32>
    %cst_77 = arith.constant dense<0.000000e+00> : vector<8xf32>
    %147 = vector.multi_reduction <add>, %146, %cst_77 [1] : vector<8x128xf32> to vector<8xf32>
    %148 = vector.shape_cast %147 : vector<8xf32> to vector<8x1xf32>
    %cst_78 = arith.constant 3.125000e-02 : f32
    %149 = vector.broadcast %cst_78 : f32 to vector<8x1xf32>
    %150 = arith.mulf %145, %149 : vector<8x1xf32>
    %cst_79 = arith.constant 3.125000e-02 : f32
    %151 = vector.broadcast %cst_79 : f32 to vector<8x1xf32>
    %152 = arith.mulf %148, %151 : vector<8x1xf32>
    %153 = arith.mulf %150, %150 : vector<8x1xf32>
    %154 = arith.subf %152, %153 : vector<8x1xf32>
    %cst_80 = arith.constant 9.99999974E-6 : f32
    %155 = vector.broadcast %cst_80 : f32 to vector<8x1xf32>
    %156 = arith.addf %154, %155 : vector<8x1xf32>
    %157 = math.rsqrt %156 : vector<8x1xf32>
    %158 = vector.broadcast %150 : vector<8x1xf32> to vector<8x128xf32>
    %159 = arith.subf %143, %158 : vector<8x128xf32>
    %160 = vector.broadcast %157 : vector<8x1xf32> to vector<8x128xf32>
    %161 = arith.mulf %159, %160 : vector<8x128xf32>
    %162 = vector.broadcast %13 : vector<1x128xf32> to vector<8x128xf32>
    %163 = arith.mulf %161, %162 : vector<8x128xf32>
    %164 = vector.broadcast %14 : vector<1x128xf32> to vector<8x128xf32>
    %165 = arith.addf %163, %164 : vector<8x128xf32>
    %166 = arith.addf %109, %165 : vector<8x128xf32>
    %cst_81 = arith.constant 0.000000e+00 : f32
    %167 = vector.broadcast %cst_81 : f32 to vector<8x128xf32>
    %168 = arith.maximumf %166, %167 : vector<8x128xf32>
    %169 = arith.truncf %168 : vector<8x128xf32> to vector<8x128xbf16>
    %c0_82 = arith.constant 0 : index
    %c0_83 = arith.constant 0 : index
    %170 = vector.load %arg24[%c0_82, %c0_83] : memref<128x16xbf16, #tpu.memory_space<vmem>>, vector<128x16xbf16>
    %cst_84 = arith.constant dense<0.000000e+00> : vector<8x16xf32>
    %171 = tpu.matmul %169, %170, %cst_84 {dimension_numbers = #tpu.dot_dimension_numbers<[1], [0], [0], [1], [0, 0, 1, 1], [], []>} : vector<8x128xbf16>, vector<128x16xbf16>, vector<8x16xf32> -> vector<8x16xf32>
    %172 = vector.broadcast %15 : vector<1x16xf32> to vector<8x16xf32>
    %173 = arith.addf %171, %172 : vector<8x16xf32>
    %c0_85 = arith.constant 0 : index
    %c0_86 = arith.constant 0 : index
    %174 = vector.load %arg26[%c0_85, %c0_86] : memref<8x16xf32, #tpu.memory_space<vmem>>, vector<8x16xf32>
    tpu.vector_store %arg26[%c0_85, %c0_86], %173 {strides = array<i32>} : memref<8x16xf32, #tpu.memory_space<vmem>>, vector<8x16xf32>,
    return
  }
  func.func @transform_0(%arg0: i32) -> (i32, i32) {
    %c0_i32 = arith.constant 0 : i32
    %c0_i32_0 = arith.constant 0 : i32
    return %arg0, %c0_i32 : i32, i32
  }
  func.func @transform_1(%arg0: i32) -> (i32, i32) {
    %c0_i32 = arith.constant 0 : i32
    %c0_i32_0 = arith.constant 0 : i32
    return %arg0, %c0_i32 : i32, i32
  }
  func.func @transform_2(%arg0: i32) -> (i32, i32) {
    %c0_i32 = arith.constant 0 : i32
    %c0_i32_0 = arith.constant 0 : i32
    %c0_i32_1 = arith.constant 0 : i32
    return %c0_i32, %c0_i32_0 : i32, i32
  }
  func.func @transform_3(%arg0: i32) -> (i32, i32) {
    %c0_i32 = arith.constant 0 : i32
    %c0_i32_0 = arith.constant 0 : i32
    %c0_i32_1 = arith.constant 0 : i32
    return %c0_i32, %c0_i32_0 : i32, i32
  }
  func.func @transform_4(%arg0: i32) -> (i32, i32) {
    %c0_i32 = arith.constant 0 : i32
    %c0_i32_0 = arith.constant 0 : i32
    %c0_i32_1 = arith.constant 0 : i32
    return %c0_i32, %c0_i32_0 : i32, i32
  }
  func.func @transform_5(%arg0: i32) -> (i32, i32) {
    %c0_i32 = arith.constant 0 : i32
    %c0_i32_0 = arith.constant 0 : i32
    %c0_i32_1 = arith.constant 0 : i32
    return %c0_i32, %c0_i32_0 : i32, i32
  }
  func.func @transform_6(%arg0: i32) -> (i32, i32) {
    %c0_i32 = arith.constant 0 : i32
    %c0_i32_0 = arith.constant 0 : i32
    %c0_i32_1 = arith.constant 0 : i32
    return %c0_i32, %c0_i32_0 : i32, i32
  }
  func.func @transform_7(%arg0: i32) -> (i32, i32) {
    %c0_i32 = arith.constant 0 : i32
    %c0_i32_0 = arith.constant 0 : i32
    %c0_i32_1 = arith.constant 0 : i32
    return %c0_i32, %c0_i32_0 : i32, i32
  }
  func.func @transform_8(%arg0: i32) -> (i32, i32) {
    %c0_i32 = arith.constant 0 : i32
    %c0_i32_0 = arith.constant 0 : i32
    %c0_i32_1 = arith.constant 0 : i32
    return %c0_i32, %c0_i32_0 : i32, i32
  }
  func.func @transform_9(%arg0: i32) -> (i32, i32) {
    %c0_i32 = arith.constant 0 : i32
    %c0_i32_0 = arith.constant 0 : i32
    %c0_i32_1 = arith.constant 0 : i32
    return %c0_i32, %c0_i32_0 : i32, i32
  }
  func.func @transform_10(%arg0: i32) -> (i32, i32) {
    %c0_i32 = arith.constant 0 : i32
    %c0_i32_0 = arith.constant 0 : i32
    %c0_i32_1 = arith.constant 0 : i32
    return %c0_i32, %c0_i32_0 : i32, i32
  }
  func.func @transform_11(%arg0: i32) -> (i32, i32) {
    %c0_i32 = arith.constant 0 : i32
    %c0_i32_0 = arith.constant 0 : i32
    %c0_i32_1 = arith.constant 0 : i32
    return %c0_i32, %c0_i32_0 : i32, i32
  }
  func.func @transform_12(%arg0: i32) -> (i32, i32) {
    %c0_i32 = arith.constant 0 : i32
    %c0_i32_0 = arith.constant 0 : i32
    %c0_i32_1 = arith.constant 0 : i32
    return %c0_i32, %c0_i32_0 : i32, i32
  }
  func.func @transform_13(%arg0: i32) -> (i32, i32) {
    %c0_i32 = arith.constant 0 : i32
    %c0_i32_0 = arith.constant 0 : i32
    %c0_i32_1 = arith.constant 0 : i32
    return %c0_i32, %c0_i32_0 : i32, i32
  }
  func.func @transform_14(%arg0: i32) -> (i32, i32) {
    %c0_i32 = arith.constant 0 : i32
    %c0_i32_0 = arith.constant 0 : i32
    %c0_i32_1 = arith.constant 0 : i32
    return %c0_i32, %c0_i32_0 : i32, i32
  }
  func.func @transform_15(%arg0: i32) -> (i32, i32) {
    %c0_i32 = arith.constant 0 : i32
    %c0_i32_0 = arith.constant 0 : i32
    %c0_i32_1 = arith.constant 0 : i32
    return %c0_i32, %c0_i32_0 : i32, i32
  }
  func.func @transform_16(%arg0: i32) -> (i32, i32) {
    %c0_i32 = arith.constant 0 : i32
    %c0_i32_0 = arith.constant 0 : i32
    %c0_i32_1 = arith.constant 0 : i32
    return %c0_i32, %c0_i32_0 : i32, i32
  }
  func.func @transform_17(%arg0: i32) -> (i32, i32) {
    %c0_i32 = arith.constant 0 : i32
    %c0_i32_0 = arith.constant 0 : i32
    %c0_i32_1 = arith.constant 0 : i32
    return %c0_i32, %c0_i32_0 : i32, i32
  }
  func.func @transform_18(%arg0: i32) -> (i32, i32) {
    %c0_i32 = arith.constant 0 : i32
    %c0_i32_0 = arith.constant 0 : i32
    %c0_i32_1 = arith.constant 0 : i32
    return %c0_i32, %c0_i32_0 : i32, i32
  }
  func.func @transform_19(%arg0: i32) -> (i32, i32) {
    %c0_i32 = arith.constant 0 : i32
    %c0_i32_0 = arith.constant 0 : i32
    %c0_i32_1 = arith.constant 0 : i32
    return %c0_i32, %c0_i32_0 : i32, i32
  }
  func.func @transform_20(%arg0: i32) -> (i32, i32) {
    %c0_i32 = arith.constant 0 : i32
    %c0_i32_0 = arith.constant 0 : i32
    %c0_i32_1 = arith.constant 0 : i32
    return %c0_i32, %c0_i32_0 : i32, i32
  }
  func.func @transform_21(%arg0: i32) -> (i32, i32) {
    %c0_i32 = arith.constant 0 : i32
    %c0_i32_0 = arith.constant 0 : i32
    %c0_i32_1 = arith.constant 0 : i32
    return %c0_i32, %c0_i32_0 : i32, i32
  }
  func.func @transform_22(%arg0: i32) -> (i32, i32) {
    %c0_i32 = arith.constant 0 : i32
    %c0_i32_0 = arith.constant 0 : i32
    %c0_i32_1 = arith.constant 0 : i32
    return %c0_i32, %c0_i32_0 : i32, i32
  }
  func.func @transform_23(%arg0: i32) -> (i32, i32) {
    %c0_i32 = arith.constant 0 : i32
    %c0_i32_0 = arith.constant 0 : i32
    %c0_i32_1 = arith.constant 0 : i32
    return %c0_i32, %c0_i32_0 : i32, i32
  }
  func.func @transform_24(%arg0: i32) -> (i32, i32) {
    %c0_i32 = arith.constant 0 : i32
    %c0_i32_0 = arith.constant 0 : i32
    %c0_i32_1 = arith.constant 0 : i32
    return %c0_i32, %c0_i32_0 : i32, i32
  }
  func.func @transform_25(%arg0: i32) -> (i32, i32) {
    %c0_i32 = arith.constant 0 : i32
    %c0_i32_0 = arith.constant 0 : i32
    return %arg0, %c0_i32 : i32, i32
  }
}

</mosaic_0001>

<llo_original>
// kernel: tpu_custom_call.1
$region0: #{tpu_custom_call.1}
  #allocation0 [shape = 'u32[]', space=smem, size = 0x4, offset = 0x4, fixed_abs, tag = 'smem constant byte address 0x4 - core index']
  #allocation1 [shape = 'u32[72,128]{1,0:T(1,128)}', space=vmem, size = 0x9000, scoped, tag = 'internal scratch']
  %s0 = inlined_call_operand.vmem [shape: f32[8,16], index: 0, kind: input, shape index: {}]
  %s1 = inlined_call_operand.hbm [shape: f32[8,8], index: 1, kind: input, shape index: {}]
  %s2 = inlined_call_operand.hbm [shape: bf16[16,128], index: 2, kind: input, shape index: {}]
  %s3 = inlined_call_operand.vmem [shape: bf16[8,128], index: 3, kind: input, shape index: {}]
  %s4 = inlined_call_operand.vmem [shape: f32[1,128], index: 4, kind: input, shape index: {}]
  %s5 = inlined_call_operand.vmem [shape: f32[1,128], index: 5, kind: input, shape index: {}]
  %s6 = inlined_call_operand.hbm [shape: f32[1,128], index: 6, kind: input, shape index: {}]
  %s7 = inlined_call_operand.vmem [shape: bf16[128,128], index: 7, kind: input, shape index: {}]
  %s8 = inlined_call_operand.vmem [shape: f32[1,128], index: 8, kind: input, shape index: {}]
  %s9 = inlined_call_operand.vmem [shape: f32[1,128], index: 9, kind: input, shape index: {}]
  %s10 = inlined_call_operand.hbm [shape: f32[1,128], index: 10, kind: input, shape index: {}]
  %s11 = inlined_call_operand.hbm [shape: bf16[128,128], index: 11, kind: input, shape index: {}]
  %s12 = inlined_call_operand.hbm [shape: f32[1,128], index: 12, kind: input, shape index: {}]
  %s13 = inlined_call_operand.hbm [shape: f32[1,128], index: 13, kind: input, shape index: {}]
  %s14 = inlined_call_operand.hbm [shape: f32[1,128], index: 14, kind: input, shape index: {}]
  %s15 = inlined_call_operand.hbm [shape: bf16[128,128], index: 15, kind: input, shape index: {}]
  %s16 = inlined_call_operand.hbm [shape: f32[1,128], index: 16, kind: input, shape index: {}]
  %s17 = inlined_call_operand.hbm [shape: f32[1,128], index: 17, kind: input, shape index: {}]
  %s18 = inlined_call_operand.vmem [shape: f32[1,128], index: 18, kind: input, shape index: {}]
  %s19 = inlined_call_operand.hbm [shape: bf16[128,128], index: 19, kind: input, shape index: {}]
  %s20 = inlined_call_operand.vmem [shape: f32[1,128], index: 20, kind: input, shape index: {}]
  %s21 = inlined_call_operand.vmem [shape: f32[1,128], index: 21, kind: input, shape index: {}]
  %s22 = inlined_call_operand.vmem [shape: f32[1,128], index: 22, kind: input, shape index: {}]
  %s23 = inlined_call_operand.vmem [shape: bf16[128,16], index: 23, kind: input, shape index: {}]
  %s24 = inlined_call_operand.vmem [shape: f32[1,16], index: 24, kind: input, shape index: {}]
  %s25 = inlined_call_operand.hbm [shape: f32[8,16], index: 25, kind: output, shape index: {}]
  %s26 = sld [smem:[#allocation0]]
  $region158: #{tpu_custom_call.1} parent=0
    _
  %s28 = ssub.s32 1, %s26
  %s29 = scalar_select 0, %s28, %s26
  $region1: #{tpu_custom_call.1} parent=0
    #allocation2 [shape = 'u8[4096]{0}', space=vmem, size = 0x1000, scoped, tag = 'input window, operand 1, single buffered']
    #allocation3 [shape = 's32[1]{0}', space=sflag, size = 0x4, scoped, tag = 'scoped memory for tpu_custom_call.1']
    #allocation4 [shape = 's32[1]{0}', space=sflag, size = 0x4, scoped, tag = 'scoped memory for tpu_custom_call.1']
    #allocation5 [shape = 'u8[4096]{0}', space=vmem, size = 0x1000, scoped, tag = 'input window, operand 2, single buffered']
    #allocation6 [shape = 's32[1]{0}', space=sflag, size = 0x4, scoped, tag = 'scoped memory for tpu_custom_call.1']
    #allocation7 [shape = 'u8[512]{0}', space=vmem, size = 0x400, scoped, tag = 'input window, operand 6, single buffered']
    #allocation8 [shape = 'u8[512]{0}', space=vmem, size = 0x400, scoped, tag = 'input window, operand 10, single buffered']
    #allocation9 [shape = 's32[1]{0}', space=sflag, size = 0x4, scoped, tag = 'scoped memory for tpu_custom_call.1']
    #allocation10 [shape = 'u8[32768]{0}', space=vmem, size = 0x8000, scoped, tag = 'input window, operand 11, single buffered']
    #allocation11 [shape = 'u8[512]{0}', space=vmem, size = 0x400, scoped, tag = 'input window, operand 12, single buffered']
    #allocation12 [shape = 's32[1]{0}', space=sflag, size = 0x4, scoped, tag = 'scoped memory for tpu_custom_call.1']
    #allocation13 [shape = 'u8[512]{0}', space=vmem, size = 0x400, scoped, tag = 'input window, operand 13, single buffered']
    #allocation14 [shape = 'u8[512]{0}', space=vmem, size = 0x400, scoped, tag = 'input window, operand 14, single buffered']
    #allocation15 [shape = 's32[1]{0}', space=sflag, size = 0x4, scoped, tag = 'scoped memory for tpu_custom_call.1']
    #allocation16 [shape = 'u8[32768]{0}', space=vmem, size = 0x8000, scoped, tag = 'input window, operand 15, single buffered']
    #allocation17 [shape = 'u8[512]{0}', space=vmem, size = 0x400, scoped, tag = 'input window, operand 16, single buffered']
    #allocation18 [shape = 's32[1]{0}', space=sflag, size = 0x4, scoped, tag = 'scoped memory for tpu_custom_call.1']
    #allocation19 [shape = 'u8[512]{0}', space=vmem, size = 0x400, scoped, tag = 'input window, operand 17, single buffered']
    #allocation20 [shape = 'u8[32768]{0}', space=vmem, size = 0x8000, scoped, tag = 'input window, operand 19, single buffered']
    #allocation21 [shape = 's32[1]{0}', space=sflag, size = 0x4, scoped, tag = 'scoped memory for tpu_custom_call.1']
    #allocation22 [shape = 'u8[4096]{0}', space=vmem, size = 0x1000, scoped, tag = 'output window, operand 0, single buffered']
    %30 = vsyncpa [#allocation3], 0
    %31 = vsyncpa [#allocation6], 0
    %32 = vsyncpa [#allocation9], 0
    %33 = vsyncpa [#allocation12], 0
    %34 = vsyncpa [#allocation15], 0
    %35 = vsyncpa [#allocation18], 0
    %36 = vsyncpa [#allocation21], 0
    %37 = vsyncpa [#allocation4], 0
    // Predicated region
    $region2: #{tpu_custom_call.1} parent=1 // pred_check
      _
    $region3: #{tpu_custom_call.1} parent=1 // pred_check_branch
      %39 = sbr.rel (0) target = $region5
    $region4: #{tpu_custom_call.1} parent=1 // pred_region
      _
    $region5: #{tpu_custom_call.1} parent=1 // pred_fallthru
      _
    // Predicated region
    $region6: #{tpu_custom_call.1} parent=1 // pred_check
      _
    $region7: #{tpu_custom_call.1} parent=1 // pred_check_branch
      %41 = sbr.rel (0) target = $region9
    $region8: #{tpu_custom_call.1} parent=1 // pred_region
      %43 = vsyncadd [#allocation3], 0
      %s45 = sshll.u32 %s1, 4
      %s46 = int_to_ptr.hbm [resolvable:$true] %s45
      %s47 = sshll.u32 [#allocation2], 4
      %s48 = int_to_ptr.vmem [resolvable:$true] %s47
      %50 = dma.hbm_to_vmem [thread:$0]  %s46, 128, %s48, [#allocation3]
    $region9: #{tpu_custom_call.1} parent=1 // pred_fallthru
      _
    // Predicated region
    $region10: #{tpu_custom_call.1} parent=1 // pred_check
      _
    $region11: #{tpu_custom_call.1} parent=1 // pred_check_branch
      %52 = sbr.rel (0) target = $region13
    $region12: #{tpu_custom_call.1} parent=1 // pred_region
      %54 = vsyncadd [#allocation6], 0
      %s55 = sshll.u32 %s2, 4
      %s56 = int_to_ptr.hbm [resolvable:$true] %s55
      %s57 = sshll.u32 [#allocation5], 4
      %s58 = int_to_ptr.vmem [resolvable:$true] %s57
      %63 = dma.hbm_to_vmem [thread:$0]  %s56, 128, %s58, [#allocation6], 64, 64, 4
    $region13: #{tpu_custom_call.1} parent=1 // pred_fallthru
      _
    // Predicated region
    $region14: #{tpu_custom_call.1} parent=1 // pred_check
      _
    $region15: #{tpu_custom_call.1} parent=1 // pred_check_branch
      %65 = sbr.rel (0) target = $region17
    $region16: #{tpu_custom_call.1} parent=1 // pred_region
      _
    $region17: #{tpu_custom_call.1} parent=1 // pred_fallthru
      _
    // Predicated region
    $region18: #{tpu_custom_call.1} parent=1 // pred_check
      _
    $region19: #{tpu_custom_call.1} parent=1 // pred_check_branch
      %67 = sbr.rel (0) target = $region21
    $region20: #{tpu_custom_call.1} parent=1 // pred_region
      _
    $region21: #{tpu_custom_call.1} parent=1 // pred_fallthru
      _
    // Predicated region
    $region22: #{tpu_custom_call.1} parent=1 // pred_check
      _
    $region23: #{tpu_custom_call.1} parent=1 // pred_check_branch
      %69 = sbr.rel (0) target = $region25
    $region24: #{tpu_custom_call.1} parent=1 // pred_region
      _
    $region25: #{tpu_custom_call.1} parent=1 // pred_fallthru
      _
    // Predicated region
    $region26: #{tpu_custom_call.1} parent=1 // pred_check
      _
    $region27: #{tpu_custom_call.1} parent=1 // pred_check_branch
      %71 = sbr.rel (0) target = $region29
    $region28: #{tpu_custom_call.1} parent=1 // pred_region
      %73 = vsyncadd [#allocation6], 0
      %s75 = sshll.u32 %s6, 4
      %s76 = int_to_ptr.hbm [resolvable:$true] %s75
      %s77 = sshll.u32 [#allocation7], 4
      %s78 = int_to_ptr.vmem [resolvable:$true] %s77
      %80 = dma.hbm_to_vmem [thread:$0]  %s76, 16, %s78, [#allocation6]
    $region29: #{tpu_custom_call.1} parent=1 // pred_fallthru
      _
    // Predicated region
    $region30: #{tpu_custom_call.1} parent=1 // pred_check
      _
    $region31: #{tpu_custom_call.1} parent=1 // pred_check_branch
      %82 = sbr.rel (0) target = $region33
    $region32: #{tpu_custom_call.1} parent=1 // pred_region
      _
    $region33: #{tpu_custom_call.1} parent=1 // pred_fallthru
      _
    // Predicated region
    $region34: #{tpu_custom_call.1} parent=1 // pred_check
      _
    $region35: #{tpu_custom_call.1} parent=1 // pred_check_branch
      %84 = sbr.rel (0) target = $region37
    $region36: #{tpu_custom_call.1} parent=1 // pred_region
      _
    $region37: #{tpu_custom_call.1} parent=1 // pred_fallthru
      _
    // Predicated region
    $region38: #{tpu_custom_call.1} parent=1 // pred_check
      _
    $region39: #{tpu_custom_call.1} parent=1 // pred_check_branch
      %86 = sbr.rel (0) target = $region41
    $region40: #{tpu_custom_call.1} parent=1 // pred_region
      _
    $region41: #{tpu_custom_call.1} parent=1 // pred_fallthru
      _
    // Predicated region
    $region42: #{tpu_custom_call.1} parent=1 // pred_check
      _
    $region43: #{tpu_custom_call.1} parent=1 // pred_check_branch
      %88 = sbr.rel (0) target = $region45
    $region44: #{tpu_custom_call.1} parent=1 // pred_region
      %90 = vsyncadd [#allocation9], 0
      %s92 = sshll.u32 %s10, 4
      %s93 = int_to_ptr.hbm [resolvable:$true] %s92
      %s94 = sshll.u32 [#allocation8], 4
      %s95 = int_to_ptr.vmem [resolvable:$true] %s94
      %97 = dma.hbm_to_vmem [thread:$0]  %s93, 16, %s95, [#allocation9]
    $region45: #{tpu_custom_call.1} parent=1 // pred_fallthru
      _
    // Predicated region
    $region46: #{tpu_custom_call.1} parent=1 // pred_check
      _
    $region47: #{tpu_custom_call.1} parent=1 // pred_check_branch
      %99 = sbr.rel (0) target = $region49
    $region48: #{tpu_custom_call.1} parent=1 // pred_region
      %101 = vsyncadd [#allocation9], 0
      %s102 = sshll.u32 %s11, 4
      %s103 = int_to_ptr.hbm [resolvable:$true] %s102
      %s104 = sshll.u32 [#allocation10], 4
      %s105 = int_to_ptr.vmem [resolvable:$true] %s104
      %110 = dma.hbm_to_vmem [thread:$0]  %s103, 1024, %s105, [#allocation9], 64, 64, 4
    $region49: #{tpu_custom_call.1} parent=1 // pred_fallthru
      _
    // Predicated region
    $region50: #{tpu_custom_call.1} parent=1 // pred_check
      _
    $region51: #{tpu_custom_call.1} parent=1 // pred_check_branch
      %112 = sbr.rel (0) target = $region53
    $region52: #{tpu_custom_call.1} parent=1 // pred_region
      %114 = vsyncadd [#allocation12], 0
      %s116 = sshll.u32 %s12, 4
      %s117 = int_to_ptr.hbm [resolvable:$true] %s116
      %s118 = sshll.u32 [#allocation11], 4
      %s119 = int_to_ptr.vmem [resolvable:$true] %s118
      %121 = dma.hbm_to_vmem [thread:$0]  %s117, 16, %s119, [#allocation12]
    $region53: #{tpu_custom_call.1} parent=1 // pred_fallthru
      _
    // Predicated region
    $region54: #{tpu_custom_call.1} parent=1 // pred_check
      _
    $region55: #{tpu_custom_call.1} parent=1 // pred_check_branch
      %123 = sbr.rel (0) target = $region57
    $region56: #{tpu_custom_call.1} parent=1 // pred_region
      %125 = vsyncadd [#allocation12], 0
      %s127 = sshll.u32 %s13, 4
      %s128 = int_to_ptr.hbm [resolvable:$true] %s127
      %s129 = sshll.u32 [#allocation13], 4
      %s130 = int_to_ptr.vmem [resolvable:$true] %s129
      %132 = dma.hbm_to_vmem [thread:$0]  %s128, 16, %s130, [#allocation12]
    $region57: #{tpu_custom_call.1} parent=1 // pred_fallthru
      _
    // Predicated region
    $region58: #{tpu_custom_call.1} parent=1 // pred_check
      _
    $region59: #{tpu_custom_call.1} parent=1 // pred_check_branch
      %134 = sbr.rel (0) target = $region61
    $region60: #{tpu_custom_call.1} parent=1 // pred_region
      %136 = vsyncadd [#allocation15], 0
      %s138 = sshll.u32 %s14, 4
      %s139 = int_to_ptr.hbm [resolvable:$true] %s138
      %s140 = sshll.u32 [#allocation14], 4
      %s141 = int_to_ptr.vmem [resolvable:$true] %s140
      %143 = dma.hbm_to_vmem [thread:$0]  %s139, 16, %s141, [#allocation15]
    $region61: #{tpu_custom_call.1} parent=1 // pred_fallthru
      _
    // Predicated region
    $region62: #{tpu_custom_call.1} parent=1 // pred_check
      _
    $region63: #{tpu_custom_call.1} parent=1 // pred_check_branch
      %145 = sbr.rel (0) target = $region65
    $region64: #{tpu_custom_call.1} parent=1 // pred_region
      %147 = vsyncadd [#allocation15], 0
      %s148 = sshll.u32 %s15, 4
      %s149 = int_to_ptr.hbm [resolvable:$true] %s148
      %s150 = sshll.u32 [#allocation16], 4
      %s151 = int_to_ptr.vmem [resolvable:$true] %s150
      %156 = dma.hbm_to_vmem [thread:$0]  %s149, 1024, %s151, [#allocation15], 64, 64, 4
    $region65: #{tpu_custom_call.1} parent=1 // pred_fallthru
      _
    // Predicated region
    $region66: #{tpu_custom_call.1} parent=1 // pred_check
      _
    $region67: #{tpu_custom_call.1} parent=1 // pred_check_branch
      %158 = sbr.rel (0) target = $region69
    $region68: #{tpu_custom_call.1} parent=1 // pred_region
      %160 = vsyncadd [#allocation18], 0
      %s162 = sshll.u32 %s16, 4
      %s163 = int_to_ptr.hbm [resolvable:$true] %s162
      %s164 = sshll.u32 [#allocation17], 4
      %s165 = int_to_ptr.vmem [resolvable:$true] %s164
      %167 = dma.hbm_to_vmem [thread:$0]  %s163, 16, %s165, [#allocation18]
    $region69: #{tpu_custom_call.1} parent=1 // pred_fallthru
      _
    // Predicated region
    $region70: #{tpu_custom_call.1} parent=1 // pred_check
      _
    $region71: #{tpu_custom_call.1} parent=1 // pred_check_branch
      %169 = sbr.rel (0) target = $region73
    $region72: #{tpu_custom_call.1} parent=1 // pred_region
      %171 = vsyncadd [#allocation18], 0
      %s173 = sshll.u32 %s17, 4
      %s174 = int_to_ptr.hbm [resolvable:$true] %s173
      %s175 = sshll.u32 [#allocation19], 4
      %s176 = int_to_ptr.vmem [resolvable:$true] %s175
      %178 = dma.hbm_to_vmem [thread:$0]  %s174, 16, %s176, [#allocation18]
    $region73: #{tpu_custom_call.1} parent=1 // pred_fallthru
      _
    // Predicated region
    $region74: #{tpu_custom_call.1} parent=1 // pred_check
      _
    $region75: #{tpu_custom_call.1} parent=1 // pred_check_branch
      %180 = sbr.rel (0) target = $region77
    $region76: #{tpu_custom_call.1} parent=1 // pred_region
      _
    $region77: #{tpu_custom_call.1} parent=1 // pred_fallthru
      _
    // Predicated region
    $region78: #{tpu_custom_call.1} parent=1 // pred_check
      _
    $region79: #{tpu_custom_call.1} parent=1 // pred_check_branch
      %182 = sbr.rel (0) target = $region81
    $region80: #{tpu_custom_call.1} parent=1 // pred_region
      %184 = vsyncadd [#allocation21], 0
      %s185 = sshll.u32 %s19, 4
      %s186 = int_to_ptr.hbm [resolvable:$true] %s185
      %s187 = sshll.u32 [#allocation20], 4
      %s188 = int_to_ptr.vmem [resolvable:$true] %s187
      %193 = dma.hbm_to_vmem [thread:$0]  %s186, 1024, %s188, [#allocation21], 64, 64, 4
    $region81: #{tpu_custom_call.1} parent=1 // pred_fallthru
      _
    // Predicated region
    $region82: #{tpu_custom_call.1} parent=1 // pred_check
      _
    $region83: #{tpu_custom_call.1} parent=1 // pred_check_branch
      %195 = sbr.rel (0) target = $region85
    $region84: #{tpu_custom_call.1} parent=1 // pred_region
      _
    $region85: #{tpu_custom_call.1} parent=1 // pred_fallthru
      _
    // Predicated region
    $region86: #{tpu_custom_call.1} parent=1 // pred_check
      _
    $region87: #{tpu_custom_call.1} parent=1 // pred_check_branch
      %197 = sbr.rel (0) target = $region89
    $region88: #{tpu_custom_call.1} parent=1 // pred_region
      _
    $region89: #{tpu_custom_call.1} parent=1 // pred_fallthru
      _
    // Predicated region
    $region90: #{tpu_custom_call.1} parent=1 // pred_check
      _
    $region91: #{tpu_custom_call.1} parent=1 // pred_check_branch
      %199 = sbr.rel (0) target = $region93
    $region92: #{tpu_custom_call.1} parent=1 // pred_region
      _
    $region93: #{tpu_custom_call.1} parent=1 // pred_fallthru
      _
    // Predicated region
    $region94: #{tpu_custom_call.1} parent=1 // pred_check
      _
    $region95: #{tpu_custom_call.1} parent=1 // pred_check_branch
      %201 = sbr.rel (0) target = $region97
    $region96: #{tpu_custom_call.1} parent=1 // pred_region
      _
    $region97: #{tpu_custom_call.1} parent=1 // pred_fallthru
      _
    // Predicated region
    $region98: #{tpu_custom_call.1} parent=1 // pred_check
      _
    $region99: #{tpu_custom_call.1} parent=1 // pred_check_branch
      %203 = sbr.rel (0) target = $region101
    $region100: #{tpu_custom_call.1} parent=1 // pred_region
      _
    $region101: #{tpu_custom_call.1} parent=1 // pred_fallthru
      _
    // Predicated region
    $region102: #{tpu_custom_call.1} parent=1 // pred_check
      _
    $region103: #{tpu_custom_call.1} parent=1 // pred_check_branch
      %205 = sbr.rel (0) target = $region105
    $region104: #{tpu_custom_call.1} parent=1 // pred_region
      %207 = dma.done [#allocation3], 128
    $region105: #{tpu_custom_call.1} parent=1 // pred_fallthru
      _
    // Predicated region
    $region106: #{tpu_custom_call.1} parent=1 // pred_check
      _
    $region107: #{tpu_custom_call.1} parent=1 // pred_check_branch
      %209 = sbr.rel (0) target = $region109
    $region108: #{tpu_custom_call.1} parent=1 // pred_region
      %211 = dma.done [#allocation6], 128
    $region109: #{tpu_custom_call.1} parent=1 // pred_fallthru
      _
    // Predicated region
    $region110: #{tpu_custom_call.1} parent=1 // pred_check
      _
    $region111: #{tpu_custom_call.1} parent=1 // pred_check_branch
      %213 = sbr.rel (0) target = $region113
    $region112: #{tpu_custom_call.1} parent=1 // pred_region
      %215 = dma.done [#allocation6], 16
    $region113: #{tpu_custom_call.1} parent=1 // pred_fallthru
      _
    // Predicated region
    $region114: #{tpu_custom_call.1} parent=1 // pred_check
      _
    $region115: #{tpu_custom_call.1} parent=1 // pred_check_branch
      %217 = sbr.rel (0) target = $region117
    $region116: #{tpu_custom_call.1} parent=1 // pred_region
      %219 = dma.done [#allocation9], 16
    $region117: #{tpu_custom_call.1} parent=1 // pred_fallthru
      _
    // Predicated region
    $region118: #{tpu_custom_call.1} parent=1 // pred_check
      _
    $region119: #{tpu_custom_call.1} parent=1 // pred_check_branch
      %221 = sbr.rel (0) target = $region121
    $region120: #{tpu_custom_call.1} parent=1 // pred_region
      %223 = dma.done [#allocation9], 1024
    $region121: #{tpu_custom_call.1} parent=1 // pred_fallthru
      _
    // Predicated region
    $region122: #{tpu_custom_call.1} parent=1 // pred_check
      _
    $region123: #{tpu_custom_call.1} parent=1 // pred_check_branch
      %225 = sbr.rel (0) target = $region125
    $region124: #{tpu_custom_call.1} parent=1 // pred_region
      %227 = dma.done [#allocation12], 16
    $region125: #{tpu_custom_call.1} parent=1 // pred_fallthru
      _
    // Predicated region
    $region126: #{tpu_custom_call.1} parent=1 // pred_check
      _
    $region127: #{tpu_custom_call.1} parent=1 // pred_check_branch
      %229 = sbr.rel (0) target = $region129
    $region128: #{tpu_custom_call.1} parent=1 // pred_region
      %231 = dma.done [#allocation12], 16
    $region129: #{tpu_custom_call.1} parent=1 // pred_fallthru
      _
    // Predicated region
    $region130: #{tpu_custom_call.1} parent=1 // pred_check
      _
    $region131: #{tpu_custom_call.1} parent=1 // pred_check_branch
      %233 = sbr.rel (0) target = $region133
    $region132: #{tpu_custom_call.1} parent=1 // pred_region
      %235 = dma.done [#allocation15], 16
    $region133: #{tpu_custom_call.1} parent=1 // pred_fallthru
      _
    // Predicated region
    $region134: #{tpu_custom_call.1} parent=1 // pred_check
      _
    $region135: #{tpu_custom_call.1} parent=1 // pred_check_branch
      %237 = sbr.rel (0) target = $region137
    $region136: #{tpu_custom_call.1} parent=1 // pred_region
      %239 = dma.done [#allocation15], 1024
    $region137: #{tpu_custom_call.1} parent=1 // pred_fallthru
      _
    // Predicated region
    $region138: #{tpu_custom_call.1} parent=1 // pred_check
      _
    $region139: #{tpu_custom_call.1} parent=1 // pred_check_branch
      %241 = sbr.rel (0) target = $region141
    $region140: #{tpu_custom_call.1} parent=1 // pred_region
      %243 = dma.done [#allocation18], 16
    $region141: #{tpu_custom_call.1} parent=1 // pred_fallthru
      _
    // Predicated region
    $region142: #{tpu_custom_call.1} parent=1 // pred_check
      _
    $region143: #{tpu_custom_call.1} parent=1 // pred_check_branch
      %245 = sbr.rel (0) target = $region145
    $region144: #{tpu_custom_call.1} parent=1 // pred_region
      %247 = dma.done [#allocation18], 16
    $region145: #{tpu_custom_call.1} parent=1 // pred_fallthru
      _
    // Predicated region
    $region146: #{tpu_custom_call.1} parent=1 // pred_check
      _
    $region147: #{tpu_custom_call.1} parent=1 // pred_check_branch
      %249 = sbr.rel (0) target = $region149
    $region148: #{tpu_custom_call.1} parent=1 // pred_region
      %251 = dma.done [#allocation21], 1024
    $region149: #{tpu_custom_call.1} parent=1 // pred_fallthru
      _
    %v253 = vld [vmem:[%s4] sm:$0x1]
    %v254 = vld [vmem:[%s5] sm:$0x1]
    %v255 = vld [vmem:[#allocation7] sm:$0x1]
    %v256 = vld [vmem:[%s8] sm:$0x1]
    %v257 = vld [vmem:[%s9] sm:$0x1]
    %v258 = vld [vmem:[#allocation8] sm:$0x1]
    %v259 = vld [vmem:[#allocation11] sm:$0x1]
    %v260 = vld [vmem:[#allocation13] sm:$0x1]
    %v261 = vld [vmem:[#allocation14] sm:$0x1]
    %v262 = vld [vmem:[#allocation17] sm:$0x1]
    %v263 = vld [vmem:[#allocation19] sm:$0x1]
    %v264 = vld [vmem:[%s18] sm:$0x1]
    %v265 = vld [vmem:[%s20] sm:$0x1]
    %v266 = vld [vmem:[%s21] sm:$0x1]
    %v267 = vld [vmem:[%s22] sm:$0x1]
    %v268 = vld [vmem:[%s24] sm:$0x1]
    %v269 = vld [vmem:[%s0] sm:$0xff]
    %v270 = vpack.c.bf16 %v269, %v269
    %v271 = vld [vmem:[#allocation5] sm:$0xf]
    %v272 = vld [vmem:[#allocation5 + $0x4] sm:$0xf]
    %v273 = vld [vmem:[#allocation2] sm:$0xff]
    %v274 = vpack.c.bf16 %v273, %v273
    %v275 = vld [vmem:[%s3] sm:$0xf]
    %vm276 = vcmask 64512
    %v278 = vsel %vm276, %v274, 0
    %vm280 = vcmask 1043456
    %v282 = vsel %vm280, %v275, 0
    %284 = vmatpush.bf16.msra.mxu0 0
    %285 = vmatpush.bf16.msra.mxu0 0
    %286 = vmatpush.bf16.msra.mxu0 0
    %287 = vmatpush.bf16.msra.mxu0 0
    %288 = vmatpush.bf16.msra.mxu0 0
    %289 = vmatpush.bf16.msra.mxu0 0
    %290 = vmatpush.bf16.msra.mxu0 0
    %291 = vmatpush.bf16.msra.mxu0 %v282
    %292 = vmatmul.bf16.gmra.mxu0 %v278
    %v293 = vpop.f32.mrf.mxu0
    %v294 = vadd.f32 0.0, %v293
    %v295 = vpop.f32.mrf.mxu0
    %296 = vdwg.mxu0
    %v299 = vunpack.c.l.b16 %v271
    %v300 = vunpack.c.l.b16 %v272
    %v301 = vpack.c.b16 %v300, %v299
    %vm303 = vcmask 130048
    %v305 = vsel %vm303, %v270, 0
    %307 = vmatpush.bf16.msra.mxu0 0
    %308 = vmatpush.bf16.msra.mxu0 0
    %309 = vmatpush.bf16.msra.mxu0 0
    %310 = vmatpush.bf16.msra.mxu0 0
    %311 = vmatpush.bf16.msra.mxu0 0
    %312 = vmatpush.bf16.msra.mxu0 0
    %313 = vmatpush.bf16.msra.mxu0 0
    %314 = vmatpush.bf16.msra.mxu0 %v301
    %315 = vmatmul.bf16.gmra.mxu0 %v305
    %v316 = vpop.f32.mrf.mxu0
    %v317 = vadd.f32 %v294, %v316
    %v318 = vpop.f32.mrf.mxu0
    %319 = vdwg.mxu0
    %v321 = vperm.slane %v253, 0
    %v323 = vadd.f32 %v317, %v321
    %324 = vadd.xlane.f32.xlu0 %v323
    %v325 = vpop.xlane.xlu0 %324
    %v326 = vmul.f32 %v323, %v323
    %327 = vadd.xlane.f32.xlu0 %v326
    %v328 = vpop.xlane.xlu0 %327
    %v329 = vmul.f32 %v325, 0.03125
    %v330 = vmul.f32 %v328, 0.03125
    %v331 = vmul.f32 %v329, %v329
    %v332 = vsub.f32 %v330, %v331
    %v333 = vadd.f32 %v332, 1e-05
    %v334 = vrsqrt.pop %v333
    %v335 = vmul.f32 %v334, %v333
    %v336 = vmul.f32 %v335, %v334
    %v337 = vmul.f32 0.5, %v336
    %v338 = vsub.f32 1.5, %v337
    %v339 = vmul.f32 %v334, %v338
    %vm340 = vweird.f32 %v333
    %vm341 = vweird.f32 %v334
    %vm342 = vmor %vm340, %vm341
    %v343 = vsel %vm342, %v334, %v339
    %v344 = vsub.f32 %v323, %v329
    %v345 = vmul.f32 %v344, %v343
    %v347 = vperm.slane %v254, 0
    %v349 = vmul.f32 %v345, %v347
    %v351 = vperm.slane %v255, 0
    %v353 = vadd.f32 %v349, %v351
    %v354 = vmax.f32 %v353, 0.0
    %v355 = vpack.c.bf16 %v354, %v354
    %v356 = vld [vmem:[%s7] sm:$0xf]
    %v357 = vld [vmem:[%s7 + $0x4] sm:$0xf]
    %v358 = vld [vmem:[%s7 + $0x8] sm:$0xf]
    %v359 = vld [vmem:[%s7 + $0xc] sm:$0xf]
    %v360 = vld [vmem:[%s7 + $0x10] sm:$0xf]
    %v361 = vld [vmem:[%s7 + $0x14] sm:$0xf]
    %v362 = vld [vmem:[%s7 + $0x18] sm:$0xf]
    %v363 = vld [vmem:[%s7 + $0x1c] sm:$0xf]
    %v364 = vld [vmem:[%s7 + $0x20] sm:$0xf]
    %v365 = vld [vmem:[%s7 + $0x24] sm:$0xf]
    %v366 = vld [vmem:[%s7 + $0x28] sm:$0xf]
    %v367 = vld [vmem:[%s7 + $0x2c] sm:$0xf]
    %v368 = vld [vmem:[%s7 + $0x30] sm:$0xf]
    %v369 = vld [vmem:[%s7 + $0x34] sm:$0xf]
    %v370 = vld [vmem:[%s7 + $0x38] sm:$0xf]
    %v371 = vld [vmem:[%s7 + $0x3c] sm:$0xf]
    %v373 = vperm.slane %v256, 0
    %v391 = vunpack.c.l.b16 %v356
    %v392 = vunpack.c.l.b16 %v357
    %v393 = vunpack.c.l.b16 %v358
    %v394 = vunpack.c.l.b16 %v359
    %v395 = vunpack.c.l.b16 %v360
    %v396 = vunpack.c.l.b16 %v361
    %v397 = vunpack.c.l.b16 %v362
    %v398 = vunpack.c.l.b16 %v363
    %v399 = vunpack.c.l.b16 %v364
    %v400 = vunpack.c.l.b16 %v365
    %v401 = vunpack.c.l.b16 %v366
    %v402 = vunpack.c.l.b16 %v367
    %v403 = vunpack.c.l.b16 %v368
    %v404 = vunpack.c.l.b16 %v369
    %v405 = vunpack.c.l.b16 %v370
    %v406 = vunpack.c.l.b16 %v371
    %v407 = vpack.c.b16 %v392, %v391
    %v408 = vpack.c.b16 %v394, %v393
    %v409 = vpack.c.b16 %v396, %v395
    %v410 = vpack.c.b16 %v398, %v397
    %v411 = vpack.c.b16 %v400, %v399
    %v412 = vpack.c.b16 %v402, %v401
    %v413 = vpack.c.b16 %v404, %v403
    %v414 = vpack.c.b16 %v406, %v405
    %423 = vmatpush.bf16.msra.mxu0 %v414
    %424 = vmatpush.bf16.msra.mxu0 %v413
    %425 = vmatpush.bf16.msra.mxu0 %v412
    %426 = vmatpush.bf16.msra.mxu0 %v411
    %427 = vmatpush.bf16.msra.mxu0 %v410
    %428 = vmatpush.bf16.msra.mxu0 %v409
    %429 = vmatpush.bf16.msra.mxu0 %v408
    %430 = vmatpush.bf16.msra.mxu0 %v407
    %431 = vmatmul.bf16.gmra.mxu0 %v355
    %v432 = vpop.f32.mrf.mxu0
    %v433 = vadd.f32 %v373, %v432
    %v434 = vpop.f32.mrf.mxu0
    %435 = vdwg.mxu0
    %436 = vadd.xlane.f32.xlu0 %v433
    %v437 = vpop.xlane.xlu0 %436
    %v438 = vmul.f32 %v433, %v433
    %439 = vadd.xlane.f32.xlu0 %v438
    %v440 = vpop.xlane.xlu0 %439
    %v441 = vmul.f32 %v437, 0.03125
    %v442 = vmul.f32 %v440, 0.03125
    %v443 = vmul.f32 %v441, %v441
    %v444 = vsub.f32 %v442, %v443
    %v445 = vadd.f32 %v444, 1e-05
    %v446 = vrsqrt.pop %v445
    %v447 = vmul.f32 %v446, %v445
    %v448 = vmul.f32 %v447, %v446
    %v449 = vmul.f32 0.5, %v448
    %v450 = vsub.f32 1.5, %v449
    %v451 = vmul.f32 %v446, %v450
    %vm452 = vweird.f32 %v445
    %vm453 = vweird.f32 %v446
    %vm454 = vmor %vm452, %vm453
    %v455 = vsel %vm454, %v446, %v451
    %v456 = vsub.f32 %v433, %v441
    %v457 = vmul.f32 %v456, %v455
    %v459 = vperm.slane %v257, 0
    %v461 = vmul.f32 %v457, %v459
    %v463 = vperm.slane %v258, 0
    %v465 = vadd.f32 %v461, %v463
    %v466 = vmax.f32 %v465, 0.0
    %v467 = vpack.c.bf16 %v466, %v466
    %v468 = vld [vmem:[#allocation10] sm:$0xf]
    %v469 = vld [vmem:[#allocation10 + $0x4] sm:$0xf]
    %v470 = vld [vmem:[#allocation10 + $0x8] sm:$0xf]
    %v471 = vld [vmem:[#allocation10 + $0xc] sm:$0xf]
    %v472 = vld [vmem:[#allocation10 + $0x10] sm:$0xf]
    %v473 = vld [vmem:[#allocation10 + $0x14] sm:$0xf]
    %v474 = vld [vmem:[#allocation10 + $0x18] sm:$0xf]
    %v475 = vld [vmem:[#allocation10 + $0x1c] sm:$0xf]
    %v476 = vld [vmem:[#allocation10 + $0x20] sm:$0xf]
    %v477 = vld [vmem:[#allocation10 + $0x24] sm:$0xf]
    %v478 = vld [vmem:[#allocation10 + $0x28] sm:$0xf]
    %v479 = vld [vmem:[#allocation10 + $0x2c] sm:$0xf]
    %v480 = vld [vmem:[#allocation10 + $0x30] sm:$0xf]
    %v481 = vld [vmem:[#allocation10 + $0x34] sm:$0xf]
    %v482 = vld [vmem:[#allocation10 + $0x38] sm:$0xf]
    %v483 = vld [vmem:[#allocation10 + $0x3c] sm:$0xf]
    %v485 = vperm.slane %v259, 0
    %v503 = vunpack.c.l.b16 %v468
    %v504 = vunpack.c.l.b16 %v469
    %v505 = vunpack.c.l.b16 %v470
    %v506 = vunpack.c.l.b16 %v471
    %v507 = vunpack.c.l.b16 %v472
    %v508 = vunpack.c.l.b16 %v473
    %v509 = vunpack.c.l.b16 %v474
    %v510 = vunpack.c.l.b16 %v475
    %v511 = vunpack.c.l.b16 %v476
    %v512 = vunpack.c.l.b16 %v477
    %v513 = vunpack.c.l.b16 %v478
    %v514 = vunpack.c.l.b16 %v479
    %v515 = vunpack.c.l.b16 %v480
    %v516 = vunpack.c.l.b16 %v481
    %v517 = vunpack.c.l.b16 %v482
    %v518 = vunpack.c.l.b16 %v483
    %v519 = vpack.c.b16 %v504, %v503
    %v520 = vpack.c.b16 %v506, %v505
    %v521 = vpack.c.b16 %v508, %v507
    %v522 = vpack.c.b16 %v510, %v509
    %v523 = vpack.c.b16 %v512, %v511
    %v524 = vpack.c.b16 %v514, %v513
    %v525 = vpack.c.b16 %v516, %v515
    %v526 = vpack.c.b16 %v518, %v517
    %535 = vmatpush.bf16.msra.mxu0 %v526
    %536 = vmatpush.bf16.msra.mxu0 %v525
    %537 = vmatpush.bf16.msra.mxu0 %v524
    %538 = vmatpush.bf16.msra.mxu0 %v523
    %539 = vmatpush.bf16.msra.mxu0 %v522
    %540 = vmatpush.bf16.msra.mxu0 %v521
    %541 = vmatpush.bf16.msra.mxu0 %v520
    %542 = vmatpush.bf16.msra.mxu0 %v519
    %543 = vmatmul.bf16.gmra.mxu0 %v467
    %v544 = vpop.f32.mrf.mxu0
    %v545 = vadd.f32 %v485, %v544
    %v546 = vpop.f32.mrf.mxu0
    %547 = vdwg.mxu0
    %548 = vadd.xlane.f32.xlu0 %v545
    %v549 = vpop.xlane.xlu0 %548
    %v550 = vmul.f32 %v545, %v545
    %551 = vadd.xlane.f32.xlu0 %v550
    %v552 = vpop.xlane.xlu0 %551
    %v553 = vmul.f32 %v549, 0.03125
    %v554 = vmul.f32 %v552, 0.03125
    %v555 = vmul.f32 %v553, %v553
    %v556 = vsub.f32 %v554, %v555
    %v557 = vadd.f32 %v556, 1e-05
    %v558 = vrsqrt.pop %v557
    %v559 = vmul.f32 %v558, %v557
    %v560 = vmul.f32 %v559, %v558
    %v561 = vmul.f32 0.5, %v560
    %v562 = vsub.f32 1.5, %v561
    %v563 = vmul.f32 %v558, %v562
    %vm564 = vweird.f32 %v557
    %vm565 = vweird.f32 %v558
    %vm566 = vmor %vm564, %vm565
    %v567 = vsel %vm566, %v558, %v563
    %v568 = vsub.f32 %v545, %v553
    %v569 = vmul.f32 %v568, %v567
    %v571 = vperm.slane %v260, 0
    %v573 = vmul.f32 %v569, %v571
    %v575 = vperm.slane %v261, 0
    %v577 = vadd.f32 %v573, %v575
    %v578 = vadd.f32 %v354, %v577
    %v579 = vmax.f32 %v578, 0.0
    %v580 = vpack.c.bf16 %v579, %v579
    %v581 = vld [vmem:[#allocation16] sm:$0xf]
    %v582 = vld [vmem:[#allocation16 + $0x4] sm:$0xf]
    %v583 = vld [vmem:[#allocation16 + $0x8] sm:$0xf]
    %v584 = vld [vmem:[#allocation16 + $0xc] sm:$0xf]
    %v585 = vld [vmem:[#allocation16 + $0x10] sm:$0xf]
    %v586 = vld [vmem:[#allocation16 + $0x14] sm:$0xf]
    %v587 = vld [vmem:[#allocation16 + $0x18] sm:$0xf]
    %v588 = vld [vmem:[#allocation16 + $0x1c] sm:$0xf]
    %v589 = vld [vmem:[#allocation16 + $0x20] sm:$0xf]
    %v590 = vld [vmem:[#allocation16 + $0x24] sm:$0xf]
    %v591 = vld [vmem:[#allocation16 + $0x28] sm:$0xf]
    %v592 = vld [vmem:[#allocation16 + $0x2c] sm:$0xf]
    %v593 = vld [vmem:[#allocation16 + $0x30] sm:$0xf]
    %v594 = vld [vmem:[#allocation16 + $0x34] sm:$0xf]
    %v595 = vld [vmem:[#allocation16 + $0x38] sm:$0xf]
    %v596 = vld [vmem:[#allocation16 + $0x3c] sm:$0xf]
    %v598 = vperm.slane %v262, 0
    %v616 = vunpack.c.l.b16 %v581
    %v617 = vunpack.c.l.b16 %v582
    %v618 = vunpack.c.l.b16 %v583
    %v619 = vunpack.c.l.b16 %v584
    %v620 = vunpack.c.l.b16 %v585
    %v621 = vunpack.c.l.b16 %v586
    %v622 = vunpack.c.l.b16 %v587
    %v623 = vunpack.c.l.b16 %v588
    %v624 = vunpack.c.l.b16 %v589
    %v625 = vunpack.c.l.b16 %v590
    %v626 = vunpack.c.l.b16 %v591
    %v627 = vunpack.c.l.b16 %v592
    %v628 = vunpack.c.l.b16 %v593
    %v629 = vunpack.c.l.b16 %v594
    %v630 = vunpack.c.l.b16 %v595
    %v631 = vunpack.c.l.b16 %v596
    %v632 = vpack.c.b16 %v617, %v616
    %v633 = vpack.c.b16 %v619, %v618
    %v634 = vpack.c.b16 %v621, %v620
    %v635 = vpack.c.b16 %v623, %v622
    %v636 = vpack.c.b16 %v625, %v624
    %v637 = vpack.c.b16 %v627, %v626
    %v638 = vpack.c.b16 %v629, %v628
    %v639 = vpack.c.b16 %v631, %v630
    %648 = vmatpush.bf16.msra.mxu0 %v639
    %649 = vmatpush.bf16.msra.mxu0 %v638
    %650 = vmatpush.bf16.msra.mxu0 %v637
    %651 = vmatpush.bf16.msra.mxu0 %v636
    %652 = vmatpush.bf16.msra.mxu0 %v635
    %653 = vmatpush.bf16.msra.mxu0 %v634
    %654 = vmatpush.bf16.msra.mxu0 %v633
    %655 = vmatpush.bf16.msra.mxu0 %v632
    %656 = vmatmul.bf16.gmra.mxu0 %v580
    %v657 = vpop.f32.mrf.mxu0
    %v658 = vadd.f32 %v598, %v657
    %v659 = vpop.f32.mrf.mxu0
    %660 = vdwg.mxu0
    %661 = vadd.xlane.f32.xlu0 %v658
    %v662 = vpop.xlane.xlu0 %661
    %v663 = vmul.f32 %v658, %v658
    %664 = vadd.xlane.f32.xlu0 %v663
    %v665 = vpop.xlane.xlu0 %664
    %v666 = vmul.f32 %v662, 0.03125
    %v667 = vmul.f32 %v665, 0.03125
    %v668 = vmul.f32 %v666, %v666
    %v669 = vsub.f32 %v667, %v668
    %v670 = vadd.f32 %v669, 1e-05
    %v671 = vrsqrt.pop %v670
    %v672 = vmul.f32 %v671, %v670
    %v673 = vmul.f32 %v672, %v671
    %v674 = vmul.f32 0.5, %v673
    %v675 = vsub.f32 1.5, %v674
    %v676 = vmul.f32 %v671, %v675
    %vm677 = vweird.f32 %v670
    %vm678 = vweird.f32 %v671
    %vm679 = vmor %vm677, %vm678
    %v680 = vsel %vm679, %v671, %v676
    %v681 = vsub.f32 %v658, %v666
    %v682 = vmul.f32 %v681, %v680
    %v684 = vperm.slane %v263, 0
    %v686 = vmul.f32 %v682, %v684
    %v688 = vperm.slane %v264, 0
    %v690 = vadd.f32 %v686, %v688
    %v691 = vmax.f32 %v690, 0.0
    %v692 = vpack.c.bf16 %v691, %v691
    %v693 = vld [vmem:[#allocation20] sm:$0xf]
    %v694 = vld [vmem:[#allocation20 + $0x4] sm:$0xf]
    %v695 = vld [vmem:[#allocation20 + $0x8] sm:$0xf]
    %v696 = vld [vmem:[#allocation20 + $0xc] sm:$0xf]
    %v697 = vld [vmem:[#allocation20 + $0x10] sm:$0xf]
    %v698 = vld [vmem:[#allocation20 + $0x14] sm:$0xf]
    %v699 = vld [vmem:[#allocation20 + $0x18] sm:$0xf]
    %v700 = vld [vmem:[#allocation20 + $0x1c] sm:$0xf]
    %v701 = vld [vmem:[#allocation20 + $0x20] sm:$0xf]
    %v702 = vld [vmem:[#allocation20 + $0x24] sm:$0xf]
    %v703 = vld [vmem:[#allocation20 + $0x28] sm:$0xf]
    %v704 = vld [vmem:[#allocation20 + $0x2c] sm:$0xf]
    %v705 = vld [vmem:[#allocation20 + $0x30] sm:$0xf]
    %v706 = vld [vmem:[#allocation20 + $0x34] sm:$0xf]
    %v707 = vld [vmem:[#allocation20 + $0x38] sm:$0xf]
    %v708 = vld [vmem:[#allocation20 + $0x3c] sm:$0xf]
    %v710 = vperm.slane %v265, 0
    %v728 = vunpack.c.l.b16 %v693
    %v729 = vunpack.c.l.b16 %v694
    %v730 = vunpack.c.l.b16 %v695
    %v731 = vunpack.c.l.b16 %v696
    %v732 = vunpack.c.l.b16 %v697
    %v733 = vunpack.c.l.b16 %v698
    %v734 = vunpack.c.l.b16 %v699
    %v735 = vunpack.c.l.b16 %v700
    %v736 = vunpack.c.l.b16 %v701
    %v737 = vunpack.c.l.b16 %v702
    %v738 = vunpack.c.l.b16 %v703
    %v739 = vunpack.c.l.b16 %v704
    %v740 = vunpack.c.l.b16 %v705
    %v741 = vunpack.c.l.b16 %v706
    %v742 = vunpack.c.l.b16 %v707
    %v743 = vunpack.c.l.b16 %v708
    %v744 = vpack.c.b16 %v729, %v728
    %v745 = vpack.c.b16 %v731, %v730
    %v746 = vpack.c.b16 %v733, %v732
    %v747 = vpack.c.b16 %v735, %v734
    %v748 = vpack.c.b16 %v737, %v736
    %v749 = vpack.c.b16 %v739, %v738
    %v750 = vpack.c.b16 %v741, %v740
    %v751 = vpack.c.b16 %v743, %v742
    %760 = vmatpush.bf16.msra.mxu0 %v751
    %761 = vmatpush.bf16.msra.mxu0 %v750
    %762 = vmatpush.bf16.msra.mxu0 %v749
    %763 = vmatpush.bf16.msra.mxu0 %v748
    %764 = vmatpush.bf16.msra.mxu0 %v747
    %765 = vmatpush.bf16.msra.mxu0 %v746
    %766 = vmatpush.bf16.msra.mxu0 %v745
    %767 = vmatpush.bf16.msra.mxu0 %v744
    %768 = vmatmul.bf16.gmra.mxu0 %v692
    %v769 = vpop.f32.mrf.mxu0
    %v770 = vadd.f32 %v710, %v769
    %v771 = vpop.f32.mrf.mxu0
    %772 = vdwg.mxu0
    %773 = vadd.xlane.f32.xlu0 %v770
    %v774 = vpop.xlane.xlu0 %773
    %v775 = vmul.f32 %v770, %v770
    %776 = vadd.xlane.f32.xlu0 %v775
    %v777 = vpop.xlane.xlu0 %776
    %v778 = vmul.f32 %v774, 0.03125
    %v779 = vmul.f32 %v777, 0.03125
    %v780 = vmul.f32 %v778, %v778
    %v781 = vsub.f32 %v779, %v780
    %v782 = vadd.f32 %v781, 1e-05
    %v783 = vrsqrt.pop %v782
    %v784 = vmul.f32 %v783, %v782
    %v785 = vmul.f32 %v784, %v783
    %v786 = vmul.f32 0.5, %v785
    %v787 = vsub.f32 1.5, %v786
    %v788 = vmul.f32 %v783, %v787
    %vm789 = vweird.f32 %v782
    %vm790 = vweird.f32 %v783
    %vm791 = vmor %vm789, %vm790
    %v792 = vsel %vm791, %v783, %v788
    %v793 = vsub.f32 %v770, %v778
    %v794 = vmul.f32 %v793, %v792
    %v796 = vperm.slane %v266, 0
    %v798 = vmul.f32 %v794, %v796
    %v800 = vperm.slane %v267, 0
    %v802 = vadd.f32 %v798, %v800
    %v803 = vadd.f32 %v579, %v802
    %v804 = vmax.f32 %v803, 0.0
    %v805 = vpack.c.bf16 %v804, %v804
    %v806 = vld [vmem:[%s23] sm:$0xf]
    %v807 = vld [vmem:[%s23 + $0x4] sm:$0xf]
    %v808 = vld [vmem:[%s23 + $0x8] sm:$0xf]
    %v809 = vld [vmem:[%s23 + $0xc] sm:$0xf]
    %v810 = vld [vmem:[%s23 + $0x10] sm:$0xf]
    %v811 = vld [vmem:[%s23 + $0x14] sm:$0xf]
    %v812 = vld [vmem:[%s23 + $0x18] sm:$0xf]
    %v813 = vld [vmem:[%s23 + $0x1c] sm:$0xf]
    %v814 = vld [vmem:[%s23 + $0x20] sm:$0xf]
    %v815 = vld [vmem:[%s23 + $0x24] sm:$0xf]
    %v816 = vld [vmem:[%s23 + $0x28] sm:$0xf]
    %v817 = vld [vmem:[%s23 + $0x2c] sm:$0xf]
    %v818 = vld [vmem:[%s23 + $0x30] sm:$0xf]
    %v819 = vld [vmem:[%s23 + $0x34] sm:$0xf]
    %v820 = vld [vmem:[%s23 + $0x38] sm:$0xf]
    %v821 = vld [vmem:[%s23 + $0x3c] sm:$0xf]
    %v823 = vperm.slane %v268, 0
    %v841 = vunpack.c.l.b16 %v806
    %v842 = vunpack.c.l.b16 %v807
    %v843 = vunpack.c.l.b16 %v808
    %v844 = vunpack.c.l.b16 %v809
    %v845 = vunpack.c.l.b16 %v810
    %v846 = vunpack.c.l.b16 %v811
    %v847 = vunpack.c.l.b16 %v812
    %v848 = vunpack.c.l.b16 %v813
    %v849 = vunpack.c.l.b16 %v814
    %v850 = vunpack.c.l.b16 %v815
    %v851 = vunpack.c.l.b16 %v816
    %v852 = vunpack.c.l.b16 %v817
    %v853 = vunpack.c.l.b16 %v818
    %v854 = vunpack.c.l.b16 %v819
    %v855 = vunpack.c.l.b16 %v820
    %v856 = vunpack.c.l.b16 %v821
    %v857 = vpack.c.b16 %v842, %v841
    %v858 = vpack.c.b16 %v844, %v843
    %v859 = vpack.c.b16 %v846, %v845
    %v860 = vpack.c.b16 %v848, %v847
    %v861 = vpack.c.b16 %v850, %v849
    %v862 = vpack.c.b16 %v852, %v851
    %v863 = vpack.c.b16 %v854, %v853
    %v864 = vpack.c.b16 %v856, %v855
    %873 = vmatpush.bf16.msra.mxu0 %v864
    %874 = vmatpush.bf16.msra.mxu0 %v863
    %875 = vmatpush.bf16.msra.mxu0 %v862
    %876 = vmatpush.bf16.msra.mxu0 %v861
    %877 = vmatpush.bf16.msra.mxu0 %v860
    %878 = vmatpush.bf16.msra.mxu0 %v859
    %879 = vmatpush.bf16.msra.mxu0 %v858
    %880 = vmatpush.bf16.msra.mxu0 %v857
    %881 = vmatmul.bf16.gmra.mxu0 %v805
    %v882 = vpop.f32.mrf.mxu0
    %v883 = vadd.f32 %v823, %v882
    %v884 = vpop.f32.mrf.mxu0
    %885 = vdwg.mxu0
    %886 = vst.msk [vmem:[#allocation22] sm:$0xff] %vm303, %v883
    // Predicated region
    $region150: #{tpu_custom_call.1} parent=1 // pred_check
      _
    $region151: #{tpu_custom_call.1} parent=1 // pred_check_branch
      %888 = sbr.rel (0) target = $region153
    $region152: #{tpu_custom_call.1} parent=1 // pred_region
      %890 = vsyncadd [#allocation4], 0
      %s892 = sshll.u32 [#allocation22], 4
      %s893 = int_to_ptr.vmem [resolvable:$true] %s892
      %s894 = sshll.u32 %s25, 4
      %s895 = int_to_ptr.hbm [resolvable:$true] %s894
      %897 = dma.vmem_to_hbm [thread:$0]  %s893, 128, %s895, [#allocation4]
    $region153: #{tpu_custom_call.1} parent=1 // pred_fallthru
      _
    // Predicated region
    $region154: #{tpu_custom_call.1} parent=1 // pred_check
      _
    $region155: #{tpu_custom_call.1} parent=1 // pred_check_branch
      %899 = sbr.rel (0) target = $region157
    $region156: #{tpu_custom_call.1} parent=1 // pred_region
      %901 = dma.done [#allocation4], 128
    $region157: #{tpu_custom_call.1} parent=1 // pred_fallthru
      _
    %902 = vsyncpa [#allocation3], 1
    %903 = vsyncpa [#allocation6], 1
    %904 = vsyncpa [#allocation9], 1
    %905 = vsyncpa [#allocation12], 1
    %906 = vsyncpa [#allocation15], 1
    %907 = vsyncpa [#allocation18], 1
    %908 = vsyncpa [#allocation21], 1
    %909 = vsyncpa [#allocation4], 1

</llo_original>
